<compile_context>
chip_gen: v7x
topology: tpu7x:2x2x1
jax: 0.10.0
libtpu: 0.0.40
codegen_flags: <defaults>
</compile_context>

<pallas_src>
import jax
import jax.numpy as jnp
from jax.experimental import pallas as pl
from jax.experimental.pallas import tpu as pltpu


def _round_up(x, m):
    return (x + m - 1) // m * m


def mc_classifier_kernel(ids_ref, attn_ref, cmult_ref,
                         table_ref, wp_ref, bp_ref, w1_ref, b1_ref,
                         w2_ref, b2_ref, out_ref):
    """Per-grid-step refs:

    ids_ref:   (tile_m, S)    int32  token ids               (streamed)
    attn_ref:  (tile_m, S)    f32    attention mask           (streamed)
    cmult_ref: (1, 1, tile_m) f32    choice-mask multiplier   (streamed, lane-dense)
    table_ref: (V, H)         bf16   embedding table          (resident)
    wp/bp:     (H, H) bf16 / (1, H) f32   pooler dense
    w1/b1:     (H, H) bf16 / (1, H) f32   output_layer Linear #1
    w2:        (1, H)         bf16   output_layer Linear #2 weight (row form)
    b2_ref:    (1,)           f32    Linear #2 bias           (SMEM scalar)
    out_ref:   (1, 1, tile_m) f32    masked scores            (lane-dense)
    """
    ids = ids_ref[...]                                   # (tm, S) int32
    mask = attn_ref[...]                                 # (tm, S) f32
    tm, s_len = ids.shape
    vocab = table_ref.shape[0]

    # Fold 1/len into the mask once per row ((tm,1) divide, not (tm,H)-wide).
    inv_len = 1.0 / jnp.maximum(jnp.sum(mask, axis=1, keepdims=True), 1.0)
    mask_scaled = mask * inv_len                         # (tm, S)

    # --- fused embedding gather + masked-mean pooling (synthetic encoder) ---
    # pool_w[m, v] = sum_s mask_scaled[m, s] * (ids[m, s] == v), built as S
    # static 2-D slices (live data stays (tm, V); no 3-D intermediate, no
    # sublane reduction).  S is a static block dim, so the loop fully unrolls.
    # TODO(synk): at real vocab sizes replace with an HBM DMA row gather.
    vocab_iota = jax.lax.broadcasted_iota(jnp.int32, (1, vocab), 1)   # (1, V)
    pool_w = jnp.zeros((tm, vocab), jnp.float32)
    for s in range(s_len):
        pool_w = pool_w + jnp.where(ids[:, s:s + 1] == vocab_iota,
                                    mask_scaled[:, s:s + 1], 0.0)     # (tm, V)

    # bf16 x bf16 MXU matmuls, f32 accumulation (no f32 copy of the weights).
    pooled = jnp.dot(pool_w.astype(jnp.bfloat16), table_ref[...],
                     preferred_element_type=jnp.float32)              # (tm, H)

    # --- BERT-style pooler: dense + tanh -> "pooler_output" ---
    pooler_out = jnp.tanh(
        jnp.dot(pooled.astype(jnp.bfloat16), wp_ref[...],
                preferred_element_type=jnp.float32) + bp_ref[...])    # (tm, H)

    # --- output_layer: Linear(H,H) -> Tanh -> Linear(H,1) ---
    h = jnp.tanh(
        jnp.dot(pooler_out.astype(jnp.bfloat16), w1_ref[...],
                preferred_element_type=jnp.float32) + b1_ref[...])    # (tm, H)

    # Linear(H, 1) as (1,H) x (tm,H)^T on the MXU (which has plenty of slack)
    # -> a lane-dense (1, tm) row directly: no (tm,1) column, no masked stores.
    scores_row = jax.lax.dot_general(
        w2_ref[...], h.astype(jnp.bfloat16),
        dimension_numbers=(((1,), (1,)), ((), ())),
        preferred_element_type=jnp.float32) + b2_ref[0]               # (1, tm)

    # --- choice masking: multiplier precomputed in wrapper (PyTorch formula) ---
    out_ref[0] = scores_row * cmult_ref[0]


def _pick_tile_m(m_rows, max_tile):
    """Multiple-of-8 tile dividing the (8-rounded) row count; prefer >=2 grid
    steps (both v7x TensorCores busy), then the largest tile to amortize the
    ~0.35us per-step pipeline overhead."""
    m8 = _round_up(m_rows, 8)
    cands = [t for t in range(8, min(m8, max_tile) + 1, 8) if m8 % t == 0]
    two_step = [t for t in cands if m8 // t >= 2]
    tile_m = max(two_step) if two_step else max(cands)
    if tile_m < 128 and m8 >= 1024:
        # No convenient divisor: trade a small tail pad for fewer grid steps.
        tile_m = min(256, max_tile)
        m8 = _round_up(m_rows, tile_m)
    return tile_m, m8


def multiple_choice_classifier(input_ids, attn_mask, choice_mask,
                               emb_table, params, *, tile_m=None):
    """input_ids: (B, C, S) int32, attn_mask: (B, C, S), choice_mask: (B, C)."""
    B, C, S = input_ids.shape
    M = B * C
    V, H = emb_table.shape

    if attn_mask is None:
        attn_mask = jnp.ones((B, C, S), jnp.float32)
    if choice_mask is None:
        choice_mask = jnp.ones((B, C), jnp.float32)

    # merge (B, C) -> M  (reshape, as in the PyTorch module)
    ids_flat = input_ids.reshape(M, S).astype(jnp.int32)
    attn_flat = attn_mask.reshape(M, S).astype(jnp.float32)
    # choice-mask transform hoisted out of the kernel (exact PyTorch semantics)
    cm = choice_mask.astype(jnp.float32)
    cmult = (cm + (1.0 - cm) * -1e19).reshape(M)

    if tile_m is None:
        # Keep per-tile f32 scratch (pool_w + activations) under ~8 MiB.
        row_scratch = (V + 4 * H + 2 * S) * 4
        max_tile = max(8, min(512, ((8 << 20) // row_scratch) // 8 * 8))
        tile_m, M_pad = _pick_tile_m(M, max_tile)
    else:
        M_pad = _round_up(M, tile_m)

    if M_pad != M:
        pad = M_pad - M            # typically <= 7 rows (sublane rounding only)
        ids_flat = jnp.pad(ids_flat, ((0, pad), (0, 0)))
        attn_flat = jnp.pad(attn_flat, ((0, pad), (0, 0)))
        cmult = jnp.pad(cmult, ((0, pad),))

    num_tiles = M_pad // tile_m
    cmult3 = cmult.reshape(num_tiles, 1, tile_m)          # lane-dense stream

    # Explicit scoped-VMEM budget: resident weights (x2 worst case), streamed
    # tiles (x2 double-buffer), in-kernel f32 scratch, plus headroom.
    resident = (V * H + 2 * H * H + H) * 2 + (2 * H + 1) * 4
    streams = tile_m * (2 * S * 4 + 8)
    scratch = tile_m * (V + 4 * H) * 4
    vmem_limit = int(2 * resident + 4 * streams + 2 * scratch + (8 << 20))
    vmem_limit = min(max(vmem_limit, 32 << 20), 64 << 20)  # v7x-safe cap

    grid = (num_tiles,)
    stream_specs = [
        pl.BlockSpec((tile_m, S), lambda i: (i, 0)),        # ids     (streamed)
        pl.BlockSpec((tile_m, S), lambda i: (i, 0)),        # attn    (streamed)
        pl.BlockSpec((1, 1, tile_m), lambda i: (i, 0, 0)),  # cmult   (streamed)
    ]
    out_spec = pl.BlockSpec((1, 1, tile_m), lambda i: (i, 0, 0))
    smem_spec = pl.BlockSpec(memory_space=pltpu.MemorySpace.SMEM)   # b2 scalar

    def run(single_buffer_weights):
        def const_spec(shape):
            if single_buffer_weights:
                # Constant block index -> no need to double-buffer: halve the
                # resident VMEM footprint (matters on v7x's 64 MiB VMEM).
                return pl.BlockSpec(shape, lambda i: (0, 0),
                                    pipeline_mode=pl.Buffered(1))
            return pl.BlockSpec(shape, lambda i: (0, 0))

        in_specs = stream_specs + [
            const_spec((V, H)),   # table (resident, bf16)
            const_spec((H, H)),   # wp
            const_spec((1, H)),   # bp
            const_spec((H, H)),   # w1
            const_spec((1, H)),   # b1
            const_spec((1, H)),   # w2 (row form)
            smem_spec,            # b2
        ]
        return pl.pallas_call(
            mc_classifier_kernel,
            out_shape=jax.ShapeDtypeStruct((num_tiles, 1, tile_m), jnp.float32),
            grid=grid,
            in_specs=in_specs,
            out_specs=out_spec,
            compiler_params=pltpu.CompilerParams(
                dimension_semantics=("parallel",),
                vmem_limit_bytes=vmem_limit),
        )(ids_flat, attn_flat, cmult3, emb_table,
          params["wp"], params["bp"], params["w1"], params["b1"],
          params["w2"], params["b2"])

    try:
        out3 = jax.block_until_ready(run(True))
    except Exception:
        # pl.Buffered(1) single-buffering unsupported on this jax build:
        # fall back to default double-buffered resident weights.
        out3 = run(False)

    return out3.reshape(M_pad)[:M].reshape(B, C)


def _reference(input_ids, attn_mask, choice_mask, emb_table, params):
    B, C, S = input_ids.shape
    ids_flat = input_ids.reshape(-1, S)
    attn_flat = attn_mask.reshape(-1, S).astype(jnp.float32)
    table = emb_table.astype(jnp.float32)
    emb = jnp.take(table, ids_flat, axis=0)                       # (M, S, H)
    denom = jnp.maximum(jnp.sum(attn_flat, axis=1, keepdims=True), 1.0)
    pooled = jnp.sum(emb * attn_flat[:, :, None], axis=1) / denom
    pooler_out = jnp.tanh(pooled @ params["wp"].astype(jnp.float32)
                          + params["bp"])
    h = jnp.tanh(pooler_out @ params["w1"].astype(jnp.float32) + params["b1"])
    scores = (h @ params["w2"].astype(jnp.float32).T
              + params["b2"][None, :]).reshape(B, C)
    cm = choice_mask + (1.0 - choice_mask) * -1e19
    return scores * cm


if __name__ == "__main__":
    B, C, S, H, V = 4, 4, 8, 32, 100    # batch, num_choices, seq, hidden, vocab
    key = jax.random.PRNGKey(0)
    k_ids, k_emb, k_wp, k_w1, k_w2 = jax.random.split(key, 5)

    # inputs (analogous to input_ids / attn_mask / choice_mask)
    input_ids = jax.random.randint(k_ids, (B, C, S), 0, V, dtype=jnp.int32)
    # deterministic attention mask: first few tokens valid, rest padded
    lengths = (jnp.arange(B * C) % S // 2 + S // 2).reshape(B, C)   # in [S/2, S)
    attn_mask = (jnp.arange(S)[None, None, :]
                 < lengths[:, :, None]).astype(jnp.float32)
    # deterministic choice mask: last choice of batch element 1 disabled
    choice_mask = jnp.ones((B, C), jnp.float32).at[1, C - 1].set(0.0)

    # deterministic parameters: weights stored in bf16, biases/accum in f32
    scale = 0.02
    emb_table = (scale * jax.random.normal(k_emb, (V, H), jnp.float32)
                 ).astype(jnp.bfloat16)
    params = {
        "wp": (scale * jax.random.normal(k_wp, (H, H), jnp.float32)
               ).astype(jnp.bfloat16),
        "bp": jnp.zeros((1, H), jnp.float32),
        "w1": (scale * jax.random.normal(k_w1, (H, H), jnp.float32)
               ).astype(jnp.bfloat16),
        "b1": jnp.full((1, H), 0.01, jnp.float32),
        "w2": (scale * jax.random.normal(k_w2, (1, H), jnp.float32)
               ).astype(jnp.bfloat16),
        "b2": jnp.full((1,), 0.05, jnp.float32),
    }

    out = multiple_choice_classifier(input_ids, attn_mask, choice_mask,
                                     emb_table, params)
    out = jax.block_until_ready(out)

    ref = _reference(input_ids, attn_mask, choice_mask, emb_table, params)
    assert out.shape == (B, C)
    # bf16 MXU operands (vs. the f32 reference math) => slightly looser tol.
    assert jnp.allclose(out, ref, rtol=2e-2, atol=2e-3), (out, ref)
    print("KERNEL_OK")
</pallas_src>

<mosaic_0001>
module attributes {stable_mosaic.version = 11 : i64} {
  func.func @mc_classifier_kernel(%arg0: i32, %arg1: memref<8x8xi32, #tpu.memory_space<vmem>>, %arg2: memref<8x8xf32, #tpu.memory_space<vmem>>, %arg3: memref<1x1x8xf32, #tpu.memory_space<vmem>>, %arg4: memref<100x32xbf16, #tpu.memory_space<vmem>>, %arg5: memref<32x32xbf16, #tpu.memory_space<vmem>>, %arg6: memref<1x32xf32, #tpu.memory_space<vmem>>, %arg7: memref<32x32xbf16, #tpu.memory_space<vmem>>, %arg8: memref<1x32xf32, #tpu.memory_space<vmem>>, %arg9: memref<1x32xbf16, #tpu.memory_space<vmem>>, %arg10: memref<1xf32, #tpu.memory_space<smem>>, %arg11: memref<1x1x8xf32, #tpu.memory_space<vmem>>) attributes {dimension_semantics = [#tpu.dimension_semantics<parallel>], iteration_bounds = array<i64: 2>, scalar_prefetch = 0 : i64, scratch_operands = 0 : i64, tpu.core_type = #tpu.core_type<tc>, window_params = [{transform_indices = @transform_0, window_bounds = array<i64: 8, 8>}, {transform_indices = @transform_1, window_bounds = array<i64: 8, 8>}, {transform_indices = @transform_2, window_bounds = array<i64: 1, 1, 8>}, {pipeline_mode = #tpu.pipeline_mode<synchronous>, transform_indices = @transform_3, window_bounds = array<i64: 100, 32>}, {pipeline_mode = #tpu.pipeline_mode<synchronous>, transform_indices = @transform_4, window_bounds = array<i64: 32, 32>}, {pipeline_mode = #tpu.pipeline_mode<synchronous>, transform_indices = @transform_5, window_bounds = array<i64: 1, 32>}, {pipeline_mode = #tpu.pipeline_mode<synchronous>, transform_indices = @transform_6, window_bounds = array<i64: 32, 32>}, {pipeline_mode = #tpu.pipeline_mode<synchronous>, transform_indices = @transform_7, window_bounds = array<i64: 1, 32>}, {pipeline_mode = #tpu.pipeline_mode<synchronous>, transform_indices = @transform_8, window_bounds = array<i64: 1, 32>}, {transform_indices = @transform_9, window_bounds = array<i64: 1>}, {transform_indices = @transform_10, window_bounds = array<i64: 1, 1, 8>}]} {
    %c0 = arith.constant 0 : index
    %c0_0 = arith.constant 0 : index
    %0 = vector.load %arg1[%c0, %c0_0] : memref<8x8xi32, #tpu.memory_space<vmem>>, vector<8x8xi32>
    %c0_1 = arith.constant 0 : index
    %c0_2 = arith.constant 0 : index
    %1 = vector.load %arg2[%c0_1, %c0_2] : memref<8x8xf32, #tpu.memory_space<vmem>>, vector<8x8xf32>
    %cst = arith.constant dense<0.000000e+00> : vector<8xf32>
    %2 = vector.multi_reduction <add>, %1, %cst [1] : vector<8x8xf32> to vector<8xf32>
    %3 = vector.shape_cast %2 : vector<8xf32> to vector<8x1xf32>
    %cst_3 = arith.constant 1.000000e+00 : f32
    %4 = vector.broadcast %cst_3 : f32 to vector<8x1xf32>
    %5 = arith.maximumf %3, %4 : vector<8x1xf32>
    %cst_4 = arith.constant 1.000000e+00 : f32
    %6 = vector.broadcast %cst_4 : f32 to vector<8x1xf32>
    %7 = arith.divf %6, %5 : vector<8x1xf32>
    %8 = vector.broadcast %7 : vector<8x1xf32> to vector<8x8xf32>
    %9 = arith.mulf %1, %8 : vector<8x8xf32>
    %10 = tpu.iota {dimensions = array<i32: 1>} : vector<1x100xi32>
    %cst_5 = arith.constant 0.000000e+00 : f32
    %11 = vector.broadcast %cst_5 : f32 to vector<8x100xf32>
    %12 = vector.extract_strided_slice %0 {offsets = [0, 0], sizes = [8, 1], strides = [1, 1]} : vector<8x8xi32> to vector<8x1xi32>
    %13 = vector.broadcast %12 : vector<8x1xi32> to vector<8x100xi32>
    %14 = vector.broadcast %10 : vector<1x100xi32> to vector<8x100xi32>
    %15 = arith.cmpi eq, %13, %14 : vector<8x100xi32>
    %16 = vector.extract_strided_slice %9 {offsets = [0, 0], sizes = [8, 1], strides = [1, 1]} : vector<8x8xf32> to vector<8x1xf32>
    %cst_6 = arith.constant 0.000000e+00 : f32
    %17 = vector.shape_cast %16 : vector<8x1xf32> to vector<8x1xf32>
    %18 = vector.broadcast %17 : vector<8x1xf32> to vector<8x100xf32>
    %19 = vector.broadcast %cst_6 : f32 to vector<8x100xf32>
    %20 = arith.select %15, %18, %19 : vector<8x100xi1>, vector<8x100xf32>
    %21 = arith.addf %11, %20 : vector<8x100xf32>
    %22 = vector.extract_strided_slice %0 {offsets = [0, 1], sizes = [8, 1], strides = [1, 1]} : vector<8x8xi32> to vector<8x1xi32>
    %23 = vector.broadcast %22 : vector<8x1xi32> to vector<8x100xi32>
    %24 = vector.broadcast %10 : vector<1x100xi32> to vector<8x100xi32>
    %25 = arith.cmpi eq, %23, %24 : vector<8x100xi32>
    %26 = vector.extract_strided_slice %9 {offsets = [0, 1], sizes = [8, 1], strides = [1, 1]} : vector<8x8xf32> to vector<8x1xf32>
    %cst_7 = arith.constant 0.000000e+00 : f32
    %27 = vector.shape_cast %26 : vector<8x1xf32> to vector<8x1xf32>
    %28 = vector.broadcast %27 : vector<8x1xf32> to vector<8x100xf32>
    %29 = vector.broadcast %cst_7 : f32 to vector<8x100xf32>
    %30 = arith.select %25, %28, %29 : vector<8x100xi1>, vector<8x100xf32>
    %31 = arith.addf %21, %30 : vector<8x100xf32>
    %32 = vector.extract_strided_slice %0 {offsets = [0, 2], sizes = [8, 1], strides = [1, 1]} : vector<8x8xi32> to vector<8x1xi32>
    %33 = vector.broadcast %32 : vector<8x1xi32> to vector<8x100xi32>
    %34 = vector.broadcast %10 : vector<1x100xi32> to vector<8x100xi32>
    %35 = arith.cmpi eq, %33, %34 : vector<8x100xi32>
    %36 = vector.extract_strided_slice %9 {offsets = [0, 2], sizes = [8, 1], strides = [1, 1]} : vector<8x8xf32> to vector<8x1xf32>
    %cst_8 = arith.constant 0.000000e+00 : f32
    %37 = vector.shape_cast %36 : vector<8x1xf32> to vector<8x1xf32>
    %38 = vector.broadcast %37 : vector<8x1xf32> to vector<8x100xf32>
    %39 = vector.broadcast %cst_8 : f32 to vector<8x100xf32>
    %40 = arith.select %35, %38, %39 : vector<8x100xi1>, vector<8x100xf32>
    %41 = arith.addf %31, %40 : vector<8x100xf32>
    %42 = vector.extract_strided_slice %0 {offsets = [0, 3], sizes = [8, 1], strides = [1, 1]} : vector<8x8xi32> to vector<8x1xi32>
    %43 = vector.broadcast %42 : vector<8x1xi32> to vector<8x100xi32>
    %44 = vector.broadcast %10 : vector<1x100xi32> to vector<8x100xi32>
    %45 = arith.cmpi eq, %43, %44 : vector<8x100xi32>
    %46 = vector.extract_strided_slice %9 {offsets = [0, 3], sizes = [8, 1], strides = [1, 1]} : vector<8x8xf32> to vector<8x1xf32>
    %cst_9 = arith.constant 0.000000e+00 : f32
    %47 = vector.shape_cast %46 : vector<8x1xf32> to vector<8x1xf32>
    %48 = vector.broadcast %47 : vector<8x1xf32> to vector<8x100xf32>
    %49 = vector.broadcast %cst_9 : f32 to vector<8x100xf32>
    %50 = arith.select %45, %48, %49 : vector<8x100xi1>, vector<8x100xf32>
    %51 = arith.addf %41, %50 : vector<8x100xf32>
    %52 = vector.extract_strided_slice %0 {offsets = [0, 4], sizes = [8, 1], strides = [1, 1]} : vector<8x8xi32> to vector<8x1xi32>
    %53 = vector.broadcast %52 : vector<8x1xi32> to vector<8x100xi32>
    %54 = vector.broadcast %10 : vector<1x100xi32> to vector<8x100xi32>
    %55 = arith.cmpi eq, %53, %54 : vector<8x100xi32>
    %56 = vector.extract_strided_slice %9 {offsets = [0, 4], sizes = [8, 1], strides = [1, 1]} : vector<8x8xf32> to vector<8x1xf32>
    %cst_10 = arith.constant 0.000000e+00 : f32
    %57 = vector.shape_cast %56 : vector<8x1xf32> to vector<8x1xf32>
    %58 = vector.broadcast %57 : vector<8x1xf32> to vector<8x100xf32>
    %59 = vector.broadcast %cst_10 : f32 to vector<8x100xf32>
    %60 = arith.select %55, %58, %59 : vector<8x100xi1>, vector<8x100xf32>
    %61 = arith.addf %51, %60 : vector<8x100xf32>
    %62 = vector.extract_strided_slice %0 {offsets = [0, 5], sizes = [8, 1], strides = [1, 1]} : vector<8x8xi32> to vector<8x1xi32>
    %63 = vector.broadcast %62 : vector<8x1xi32> to vector<8x100xi32>
    %64 = vector.broadcast %10 : vector<1x100xi32> to vector<8x100xi32>
    %65 = arith.cmpi eq, %63, %64 : vector<8x100xi32>
    %66 = vector.extract_strided_slice %9 {offsets = [0, 5], sizes = [8, 1], strides = [1, 1]} : vector<8x8xf32> to vector<8x1xf32>
    %cst_11 = arith.constant 0.000000e+00 : f32
    %67 = vector.shape_cast %66 : vector<8x1xf32> to vector<8x1xf32>
    %68 = vector.broadcast %67 : vector<8x1xf32> to vector<8x100xf32>
    %69 = vector.broadcast %cst_11 : f32 to vector<8x100xf32>
    %70 = arith.select %65, %68, %69 : vector<8x100xi1>, vector<8x100xf32>
    %71 = arith.addf %61, %70 : vector<8x100xf32>
    %72 = vector.extract_strided_slice %0 {offsets = [0, 6], sizes = [8, 1], strides = [1, 1]} : vector<8x8xi32> to vector<8x1xi32>
    %73 = vector.broadcast %72 : vector<8x1xi32> to vector<8x100xi32>
    %74 = vector.broadcast %10 : vector<1x100xi32> to vector<8x100xi32>
    %75 = arith.cmpi eq, %73, %74 : vector<8x100xi32>
    %76 = vector.extract_strided_slice %9 {offsets = [0, 6], sizes = [8, 1], strides = [1, 1]} : vector<8x8xf32> to vector<8x1xf32>
    %cst_12 = arith.constant 0.000000e+00 : f32
    %77 = vector.shape_cast %76 : vector<8x1xf32> to vector<8x1xf32>
    %78 = vector.broadcast %77 : vector<8x1xf32> to vector<8x100xf32>
    %79 = vector.broadcast %cst_12 : f32 to vector<8x100xf32>
    %80 = arith.select %75, %78, %79 : vector<8x100xi1>, vector<8x100xf32>
    %81 = arith.addf %71, %80 : vector<8x100xf32>
    %82 = vector.extract_strided_slice %0 {offsets = [0, 7], sizes = [8, 1], strides = [1, 1]} : vector<8x8xi32> to vector<8x1xi32>
    %83 = vector.broadcast %82 : vector<8x1xi32> to vector<8x100xi32>
    %84 = vector.broadcast %10 : vector<1x100xi32> to vector<8x100xi32>
    %85 = arith.cmpi eq, %83, %84 : vector<8x100xi32>
    %86 = vector.extract_strided_slice %9 {offsets = [0, 7], sizes = [8, 1], strides = [1, 1]} : vector<8x8xf32> to vector<8x1xf32>
    %cst_13 = arith.constant 0.000000e+00 : f32
    %87 = vector.shape_cast %86 : vector<8x1xf32> to vector<8x1xf32>
    %88 = vector.broadcast %87 : vector<8x1xf32> to vector<8x100xf32>
    %89 = vector.broadcast %cst_13 : f32 to vector<8x100xf32>
    %90 = arith.select %85, %88, %89 : vector<8x100xi1>, vector<8x100xf32>
    %91 = arith.addf %81, %90 : vector<8x100xf32>
    %92 = arith.truncf %91 : vector<8x100xf32> to vector<8x100xbf16>
    %c0_14 = arith.constant 0 : index
    %c0_15 = arith.constant 0 : index
    %93 = vector.load %arg4[%c0_14, %c0_15] : memref<100x32xbf16, #tpu.memory_space<vmem>>, vector<100x32xbf16>
    %cst_16 = arith.constant dense<0.000000e+00> : vector<8x32xf32>
    %94 = tpu.matmul %92, %93, %cst_16 {dimension_numbers = #tpu.dot_dimension_numbers<[1], [0], [0], [1], [0, 0, 1, 1], [], []>} : vector<8x100xbf16>, vector<100x32xbf16>, vector<8x32xf32> -> vector<8x32xf32>
    %95 = arith.truncf %94 : vector<8x32xf32> to vector<8x32xbf16>
    %c0_17 = arith.constant 0 : index
    %c0_18 = arith.constant 0 : index
    %96 = vector.load %arg5[%c0_17, %c0_18] : memref<32x32xbf16, #tpu.memory_space<vmem>>, vector<32x32xbf16>
    %cst_19 = arith.constant dense<0.000000e+00> : vector<8x32xf32>
    %97 = tpu.matmul %95, %96, %cst_19 {dimension_numbers = #tpu.dot_dimension_numbers<[1], [0], [0], [1], [0, 0, 1, 1], [], []>} : vector<8x32xbf16>, vector<32x32xbf16>, vector<8x32xf32> -> vector<8x32xf32>
    %c0_20 = arith.constant 0 : index
    %c0_21 = arith.constant 0 : index
    %98 = vector.load %arg6[%c0_20, %c0_21] : memref<1x32xf32, #tpu.memory_space<vmem>>, vector<1x32xf32>
    %99 = vector.broadcast %98 : vector<1x32xf32> to vector<8x32xf32>
    %100 = arith.addf %97, %99 : vector<8x32xf32>
    %101 = math.tanh %100 : vector<8x32xf32>
    %102 = arith.truncf %101 : vector<8x32xf32> to vector<8x32xbf16>
    %c0_22 = arith.constant 0 : index
    %c0_23 = arith.constant 0 : index
    %103 = vector.load %arg7[%c0_22, %c0_23] : memref<32x32xbf16, #tpu.memory_space<vmem>>, vector<32x32xbf16>
    %cst_24 = arith.constant dense<0.000000e+00> : vector<8x32xf32>
    %104 = tpu.matmul %102, %103, %cst_24 {dimension_numbers = #tpu.dot_dimension_numbers<[1], [0], [0], [1], [0, 0, 1, 1], [], []>} : vector<8x32xbf16>, vector<32x32xbf16>, vector<8x32xf32> -> vector<8x32xf32>
    %c0_25 = arith.constant 0 : index
    %c0_26 = arith.constant 0 : index
    %105 = vector.load %arg8[%c0_25, %c0_26] : memref<1x32xf32, #tpu.memory_space<vmem>>, vector<1x32xf32>
    %106 = vector.broadcast %105 : vector<1x32xf32> to vector<8x32xf32>
    %107 = arith.addf %104, %106 : vector<8x32xf32>
    %108 = math.tanh %107 : vector<8x32xf32>
    %c0_27 = arith.constant 0 : index
    %c0_28 = arith.constant 0 : index
    %109 = vector.load %arg9[%c0_27, %c0_28] : memref<1x32xbf16, #tpu.memory_space<vmem>>, vector<1x32xbf16>
    %110 = arith.truncf %108 : vector<8x32xf32> to vector<8x32xbf16>
    %cst_29 = arith.constant dense<0.000000e+00> : vector<1x8xf32>
    %111 = tpu.matmul %109, %110, %cst_29 {dimension_numbers = #tpu.dot_dimension_numbers<[1], [1], [0], [0], [0, 0, 1, 0], [], []>} : vector<1x32xbf16>, vector<8x32xbf16>, vector<1x8xf32> -> vector<1x8xf32>
    %c0_30 = arith.constant 0 : index
    %112 = memref.load %arg10[%c0_30] : memref<1xf32, #tpu.memory_space<smem>>
    %113 = vector.broadcast %112 : f32 to vector<1x8xf32>
    %114 = arith.addf %111, %113 : vector<1x8xf32>
    %c0_31 = arith.constant 0 : index
    %c0_32 = arith.constant 0 : index
    %c0_33 = arith.constant 0 : index
    %115 = vector.load %arg3[%c0_31, %c0_32, %c0_33] : memref<1x1x8xf32, #tpu.memory_space<vmem>>, vector<1x1x8xf32>
    %116 = vector.shape_cast %115 : vector<1x1x8xf32> to vector<1x8xf32>
    %117 = arith.mulf %114, %116 : vector<1x8xf32>
    %c0_34 = arith.constant 0 : index
    %c0_35 = arith.constant 0 : index
    %c0_36 = arith.constant 0 : index
    %118 = vector.load %arg11[%c0_34, %c0_35, %c0_36] : memref<1x1x8xf32, #tpu.memory_space<vmem>>, vector<1x1x8xf32>
    %119 = vector.shape_cast %118 : vector<1x1x8xf32> to vector<1x8xf32>
    %120 = vector.shape_cast %117 : vector<1x8xf32> to vector<1x1x8xf32>
    tpu.vector_store %arg11[%c0_34, %c0_35, %c0_36], %120 {strides = array<i32>} : memref<1x1x8xf32, #tpu.memory_space<vmem>>, vector<1x1x8xf32>,
    return
  }
  func.func @transform_0(%arg0: i32) -> (i32, i32) {
    %c0_i32 = arith.constant 0 : i32
    %c0_i32_0 = arith.constant 0 : i32
    return %arg0, %c0_i32 : i32, i32
  }
  func.func @transform_1(%arg0: i32) -> (i32, i32) {
    %c0_i32 = arith.constant 0 : i32
    %c0_i32_0 = arith.constant 0 : i32
    return %arg0, %c0_i32 : i32, i32
  }
  func.func @transform_2(%arg0: i32) -> (i32, i32, i32) {
    %c0_i32 = arith.constant 0 : i32
    %c0_i32_0 = arith.constant 0 : i32
    %c0_i32_1 = arith.constant 0 : i32
    return %arg0, %c0_i32, %c0_i32_0 : i32, i32, i32
  }
  func.func @transform_3(%arg0: i32) -> (i32, i32) {
    %c0_i32 = arith.constant 0 : i32
    %c0_i32_0 = arith.constant 0 : i32
    %c0_i32_1 = arith.constant 0 : i32
    return %c0_i32, %c0_i32_0 : i32, i32
  }
  func.func @transform_4(%arg0: i32) -> (i32, i32) {
    %c0_i32 = arith.constant 0 : i32
    %c0_i32_0 = arith.constant 0 : i32
    %c0_i32_1 = arith.constant 0 : i32
    return %c0_i32, %c0_i32_0 : i32, i32
  }
  func.func @transform_5(%arg0: i32) -> (i32, i32) {
    %c0_i32 = arith.constant 0 : i32
    %c0_i32_0 = arith.constant 0 : i32
    %c0_i32_1 = arith.constant 0 : i32
    return %c0_i32, %c0_i32_0 : i32, i32
  }
  func.func @transform_6(%arg0: i32) -> (i32, i32) {
    %c0_i32 = arith.constant 0 : i32
    %c0_i32_0 = arith.constant 0 : i32
    %c0_i32_1 = arith.constant 0 : i32
    return %c0_i32, %c0_i32_0 : i32, i32
  }
  func.func @transform_7(%arg0: i32) -> (i32, i32) {
    %c0_i32 = arith.constant 0 : i32
    %c0_i32_0 = arith.constant 0 : i32
    %c0_i32_1 = arith.constant 0 : i32
    return %c0_i32, %c0_i32_0 : i32, i32
  }
  func.func @transform_8(%arg0: i32) -> (i32, i32) {
    %c0_i32 = arith.constant 0 : i32
    %c0_i32_0 = arith.constant 0 : i32
    %c0_i32_1 = arith.constant 0 : i32
    return %c0_i32, %c0_i32_0 : i32, i32
  }
  func.func @transform_9(%arg0: i32) -> i32 {
    %c0_i32 = arith.constant 0 : i32
    %c0_i32_0 = arith.constant 0 : i32
    return %c0_i32 : i32
  }
  func.func @transform_10(%arg0: i32) -> (i32, i32, i32) {
    %c0_i32 = arith.constant 0 : i32
    %c0_i32_0 = arith.constant 0 : i32
    %c0_i32_1 = arith.constant 0 : i32
    return %arg0, %c0_i32, %c0_i32_0 : i32, i32, i32
  }
}

module attributes {stable_mosaic.version = 11 : i64} {
  func.func @mc_classifier_kernel(%arg0: i32, %arg1: memref<8x8xi32, #tpu.memory_space<vmem>>, %arg2: memref<8x8xf32, #tpu.memory_space<vmem>>, %arg3: memref<1x1x8xf32, #tpu.memory_space<vmem>>, %arg4: memref<100x32xbf16, #tpu.memory_space<vmem>>, %arg5: memref<32x32xbf16, #tpu.memory_space<vmem>>, %arg6: memref<1x32xf32, #tpu.memory_space<vmem>>, %arg7: memref<32x32xbf16, #tpu.memory_space<vmem>>, %arg8: memref<1x32xf32, #tpu.memory_space<vmem>>, %arg9: memref<1x32xbf16, #tpu.memory_space<vmem>>, %arg10: memref<1xf32, #tpu.memory_space<smem>>, %arg11: memref<1x1x8xf32, #tpu.memory_space<vmem>>) attributes {dimension_semantics = [#tpu.dimension_semantics<parallel>], iteration_bounds = array<i64: 2>, scalar_prefetch = 0 : i64, scratch_operands = 0 : i64, tpu.core_type = #tpu.core_type<tc>, window_params = [{transform_indices = @transform_0, window_bounds = array<i64: 8, 8>}, {transform_indices = @transform_1, window_bounds = array<i64: 8, 8>}, {transform_indices = @transform_2, window_bounds = array<i64: 1, 1, 8>}, {pipeline_mode = #tpu.pipeline_mode<synchronous>, transform_indices = @transform_3, window_bounds = array<i64: 100, 32>}, {pipeline_mode = #tpu.pipeline_mode<synchronous>, transform_indices = @transform_4, window_bounds = array<i64: 32, 32>}, {pipeline_mode = #tpu.pipeline_mode<synchronous>, transform_indices = @transform_5, window_bounds = array<i64: 1, 32>}, {pipeline_mode = #tpu.pipeline_mode<synchronous>, transform_indices = @transform_6, window_bounds = array<i64: 32, 32>}, {pipeline_mode = #tpu.pipeline_mode<synchronous>, transform_indices = @transform_7, window_bounds = array<i64: 1, 32>}, {pipeline_mode = #tpu.pipeline_mode<synchronous>, transform_indices = @transform_8, window_bounds = array<i64: 1, 32>}, {transform_indices = @transform_9, window_bounds = array<i64: 1>}, {transform_indices = @transform_10, window_bounds = array<i64: 1, 1, 8>}]} {
    %c0 = arith.constant 0 : index
    %c0_0 = arith.constant 0 : index
    %0 = vector.load %arg1[%c0, %c0_0] : memref<8x8xi32, #tpu.memory_space<vmem>>, vector<8x8xi32>
    %c0_1 = arith.constant 0 : index
    %c0_2 = arith.constant 0 : index
    %1 = vector.load %arg2[%c0_1, %c0_2] : memref<8x8xf32, #tpu.memory_space<vmem>>, vector<8x8xf32>
    %cst = arith.constant dense<0.000000e+00> : vector<8xf32>
    %2 = vector.multi_reduction <add>, %1, %cst [1] : vector<8x8xf32> to vector<8xf32>
    %3 = vector.shape_cast %2 : vector<8xf32> to vector<8x1xf32>
    %cst_3 = arith.constant 1.000000e+00 : f32
    %4 = vector.broadcast %cst_3 : f32 to vector<8x1xf32>
    %5 = arith.maximumf %3, %4 : vector<8x1xf32>
    %cst_4 = arith.constant 1.000000e+00 : f32
    %6 = vector.broadcast %cst_4 : f32 to vector<8x1xf32>
    %7 = arith.divf %6, %5 : vector<8x1xf32>
    %8 = vector.broadcast %7 : vector<8x1xf32> to vector<8x8xf32>
    %9 = arith.mulf %1, %8 : vector<8x8xf32>
    %10 = tpu.iota {dimensions = array<i32: 1>} : vector<1x100xi32>
    %cst_5 = arith.constant 0.000000e+00 : f32
    %11 = vector.broadcast %cst_5 : f32 to vector<8x100xf32>
    %12 = vector.extract_strided_slice %0 {offsets = [0, 0], sizes = [8, 1], strides = [1, 1]} : vector<8x8xi32> to vector<8x1xi32>
    %13 = vector.broadcast %12 : vector<8x1xi32> to vector<8x100xi32>
    %14 = vector.broadcast %10 : vector<1x100xi32> to vector<8x100xi32>
    %15 = arith.cmpi eq, %13, %14 : vector<8x100xi32>
    %16 = vector.extract_strided_slice %9 {offsets = [0, 0], sizes = [8, 1], strides = [1, 1]} : vector<8x8xf32> to vector<8x1xf32>
    %cst_6 = arith.constant 0.000000e+00 : f32
    %17 = vector.shape_cast %16 : vector<8x1xf32> to vector<8x1xf32>
    %18 = vector.broadcast %17 : vector<8x1xf32> to vector<8x100xf32>
    %19 = vector.broadcast %cst_6 : f32 to vector<8x100xf32>
    %20 = arith.select %15, %18, %19 : vector<8x100xi1>, vector<8x100xf32>
    %21 = arith.addf %11, %20 : vector<8x100xf32>
    %22 = vector.extract_strided_slice %0 {offsets = [0, 1], sizes = [8, 1], strides = [1, 1]} : vector<8x8xi32> to vector<8x1xi32>
    %23 = vector.broadcast %22 : vector<8x1xi32> to vector<8x100xi32>
    %24 = vector.broadcast %10 : vector<1x100xi32> to vector<8x100xi32>
    %25 = arith.cmpi eq, %23, %24 : vector<8x100xi32>
    %26 = vector.extract_strided_slice %9 {offsets = [0, 1], sizes = [8, 1], strides = [1, 1]} : vector<8x8xf32> to vector<8x1xf32>
    %cst_7 = arith.constant 0.000000e+00 : f32
    %27 = vector.shape_cast %26 : vector<8x1xf32> to vector<8x1xf32>
    %28 = vector.broadcast %27 : vector<8x1xf32> to vector<8x100xf32>
    %29 = vector.broadcast %cst_7 : f32 to vector<8x100xf32>
    %30 = arith.select %25, %28, %29 : vector<8x100xi1>, vector<8x100xf32>
    %31 = arith.addf %21, %30 : vector<8x100xf32>
    %32 = vector.extract_strided_slice %0 {offsets = [0, 2], sizes = [8, 1], strides = [1, 1]} : vector<8x8xi32> to vector<8x1xi32>
    %33 = vector.broadcast %32 : vector<8x1xi32> to vector<8x100xi32>
    %34 = vector.broadcast %10 : vector<1x100xi32> to vector<8x100xi32>
    %35 = arith.cmpi eq, %33, %34 : vector<8x100xi32>
    %36 = vector.extract_strided_slice %9 {offsets = [0, 2], sizes = [8, 1], strides = [1, 1]} : vector<8x8xf32> to vector<8x1xf32>
    %cst_8 = arith.constant 0.000000e+00 : f32
    %37 = vector.shape_cast %36 : vector<8x1xf32> to vector<8x1xf32>
    %38 = vector.broadcast %37 : vector<8x1xf32> to vector<8x100xf32>
    %39 = vector.broadcast %cst_8 : f32 to vector<8x100xf32>
    %40 = arith.select %35, %38, %39 : vector<8x100xi1>, vector<8x100xf32>
    %41 = arith.addf %31, %40 : vector<8x100xf32>
    %42 = vector.extract_strided_slice %0 {offsets = [0, 3], sizes = [8, 1], strides = [1, 1]} : vector<8x8xi32> to vector<8x1xi32>
    %43 = vector.broadcast %42 : vector<8x1xi32> to vector<8x100xi32>
    %44 = vector.broadcast %10 : vector<1x100xi32> to vector<8x100xi32>
    %45 = arith.cmpi eq, %43, %44 : vector<8x100xi32>
    %46 = vector.extract_strided_slice %9 {offsets = [0, 3], sizes = [8, 1], strides = [1, 1]} : vector<8x8xf32> to vector<8x1xf32>
    %cst_9 = arith.constant 0.000000e+00 : f32
    %47 = vector.shape_cast %46 : vector<8x1xf32> to vector<8x1xf32>
    %48 = vector.broadcast %47 : vector<8x1xf32> to vector<8x100xf32>
    %49 = vector.broadcast %cst_9 : f32 to vector<8x100xf32>
    %50 = arith.select %45, %48, %49 : vector<8x100xi1>, vector<8x100xf32>
    %51 = arith.addf %41, %50 : vector<8x100xf32>
    %52 = vector.extract_strided_slice %0 {offsets = [0, 4], sizes = [8, 1], strides = [1, 1]} : vector<8x8xi32> to vector<8x1xi32>
    %53 = vector.broadcast %52 : vector<8x1xi32> to vector<8x100xi32>
    %54 = vector.broadcast %10 : vector<1x100xi32> to vector<8x100xi32>
    %55 = arith.cmpi eq, %53, %54 : vector<8x100xi32>
    %56 = vector.extract_strided_slice %9 {offsets = [0, 4], sizes = [8, 1], strides = [1, 1]} : vector<8x8xf32> to vector<8x1xf32>
    %cst_10 = arith.constant 0.000000e+00 : f32
    %57 = vector.shape_cast %56 : vector<8x1xf32> to vector<8x1xf32>
    %58 = vector.broadcast %57 : vector<8x1xf32> to vector<8x100xf32>
    %59 = vector.broadcast %cst_10 : f32 to vector<8x100xf32>
    %60 = arith.select %55, %58, %59 : vector<8x100xi1>, vector<8x100xf32>
    %61 = arith.addf %51, %60 : vector<8x100xf32>
    %62 = vector.extract_strided_slice %0 {offsets = [0, 5], sizes = [8, 1], strides = [1, 1]} : vector<8x8xi32> to vector<8x1xi32>
    %63 = vector.broadcast %62 : vector<8x1xi32> to vector<8x100xi32>
    %64 = vector.broadcast %10 : vector<1x100xi32> to vector<8x100xi32>
    %65 = arith.cmpi eq, %63, %64 : vector<8x100xi32>
    %66 = vector.extract_strided_slice %9 {offsets = [0, 5], sizes = [8, 1], strides = [1, 1]} : vector<8x8xf32> to vector<8x1xf32>
    %cst_11 = arith.constant 0.000000e+00 : f32
    %67 = vector.shape_cast %66 : vector<8x1xf32> to vector<8x1xf32>
    %68 = vector.broadcast %67 : vector<8x1xf32> to vector<8x100xf32>
    %69 = vector.broadcast %cst_11 : f32 to vector<8x100xf32>
    %70 = arith.select %65, %68, %69 : vector<8x100xi1>, vector<8x100xf32>
    %71 = arith.addf %61, %70 : vector<8x100xf32>
    %72 = vector.extract_strided_slice %0 {offsets = [0, 6], sizes = [8, 1], strides = [1, 1]} : vector<8x8xi32> to vector<8x1xi32>
    %73 = vector.broadcast %72 : vector<8x1xi32> to vector<8x100xi32>
    %74 = vector.broadcast %10 : vector<1x100xi32> to vector<8x100xi32>
    %75 = arith.cmpi eq, %73, %74 : vector<8x100xi32>
    %76 = vector.extract_strided_slice %9 {offsets = [0, 6], sizes = [8, 1], strides = [1, 1]} : vector<8x8xf32> to vector<8x1xf32>
    %cst_12 = arith.constant 0.000000e+00 : f32
    %77 = vector.shape_cast %76 : vector<8x1xf32> to vector<8x1xf32>
    %78 = vector.broadcast %77 : vector<8x1xf32> to vector<8x100xf32>
    %79 = vector.broadcast %cst_12 : f32 to vector<8x100xf32>
    %80 = arith.select %75, %78, %79 : vector<8x100xi1>, vector<8x100xf32>
    %81 = arith.addf %71, %80 : vector<8x100xf32>
    %82 = vector.extract_strided_slice %0 {offsets = [0, 7], sizes = [8, 1], strides = [1, 1]} : vector<8x8xi32> to vector<8x1xi32>
    %83 = vector.broadcast %82 : vector<8x1xi32> to vector<8x100xi32>
    %84 = vector.broadcast %10 : vector<1x100xi32> to vector<8x100xi32>
    %85 = arith.cmpi eq, %83, %84 : vector<8x100xi32>
    %86 = vector.extract_strided_slice %9 {offsets = [0, 7], sizes = [8, 1], strides = [1, 1]} : vector<8x8xf32> to vector<8x1xf32>
    %cst_13 = arith.constant 0.000000e+00 : f32
    %87 = vector.shape_cast %86 : vector<8x1xf32> to vector<8x1xf32>
    %88 = vector.broadcast %87 : vector<8x1xf32> to vector<8x100xf32>
    %89 = vector.broadcast %cst_13 : f32 to vector<8x100xf32>
    %90 = arith.select %85, %88, %89 : vector<8x100xi1>, vector<8x100xf32>
    %91 = arith.addf %81, %90 : vector<8x100xf32>
    %92 = arith.truncf %91 : vector<8x100xf32> to vector<8x100xbf16>
    %c0_14 = arith.constant 0 : index
    %c0_15 = arith.constant 0 : index
    %93 = vector.load %arg4[%c0_14, %c0_15] : memref<100x32xbf16, #tpu.memory_space<vmem>>, vector<100x32xbf16>
    %cst_16 = arith.constant dense<0.000000e+00> : vector<8x32xf32>
    %94 = tpu.matmul %92, %93, %cst_16 {dimension_numbers = #tpu.dot_dimension_numbers<[1], [0], [0], [1], [0, 0, 1, 1], [], []>} : vector<8x100xbf16>, vector<100x32xbf16>, vector<8x32xf32> -> vector<8x32xf32>
    %95 = arith.truncf %94 : vector<8x32xf32> to vector<8x32xbf16>
    %c0_17 = arith.constant 0 : index
    %c0_18 = arith.constant 0 : index
    %96 = vector.load %arg5[%c0_17, %c0_18] : memref<32x32xbf16, #tpu.memory_space<vmem>>, vector<32x32xbf16>
    %cst_19 = arith.constant dense<0.000000e+00> : vector<8x32xf32>
    %97 = tpu.matmul %95, %96, %cst_19 {dimension_numbers = #tpu.dot_dimension_numbers<[1], [0], [0], [1], [0, 0, 1, 1], [], []>} : vector<8x32xbf16>, vector<32x32xbf16>, vector<8x32xf32> -> vector<8x32xf32>
    %c0_20 = arith.constant 0 : index
    %c0_21 = arith.constant 0 : index
    %98 = vector.load %arg6[%c0_20, %c0_21] : memref<1x32xf32, #tpu.memory_space<vmem>>, vector<1x32xf32>
    %99 = vector.broadcast %98 : vector<1x32xf32> to vector<8x32xf32>
    %100 = arith.addf %97, %99 : vector<8x32xf32>
    %101 = math.tanh %100 : vector<8x32xf32>
    %102 = arith.truncf %101 : vector<8x32xf32> to vector<8x32xbf16>
    %c0_22 = arith.constant 0 : index
    %c0_23 = arith.constant 0 : index
    %103 = vector.load %arg7[%c0_22, %c0_23] : memref<32x32xbf16, #tpu.memory_space<vmem>>, vector<32x32xbf16>
    %cst_24 = arith.constant dense<0.000000e+00> : vector<8x32xf32>
    %104 = tpu.matmul %102, %103, %cst_24 {dimension_numbers = #tpu.dot_dimension_numbers<[1], [0], [0], [1], [0, 0, 1, 1], [], []>} : vector<8x32xbf16>, vector<32x32xbf16>, vector<8x32xf32> -> vector<8x32xf32>
    %c0_25 = arith.constant 0 : index
    %c0_26 = arith.constant 0 : index
    %105 = vector.load %arg8[%c0_25, %c0_26] : memref<1x32xf32, #tpu.memory_space<vmem>>, vector<1x32xf32>
    %106 = vector.broadcast %105 : vector<1x32xf32> to vector<8x32xf32>
    %107 = arith.addf %104, %106 : vector<8x32xf32>
    %108 = math.tanh %107 : vector<8x32xf32>
    %c0_27 = arith.constant 0 : index
    %c0_28 = arith.constant 0 : index
    %109 = vector.load %arg9[%c0_27, %c0_28] : memref<1x32xbf16, #tpu.memory_space<vmem>>, vector<1x32xbf16>
    %110 = arith.truncf %108 : vector<8x32xf32> to vector<8x32xbf16>
    %cst_29 = arith.constant dense<0.000000e+00> : vector<1x8xf32>
    %111 = tpu.matmul %109, %110, %cst_29 {dimension_numbers = #tpu.dot_dimension_numbers<[1], [1], [0], [0], [0, 0, 1, 0], [], []>} : vector<1x32xbf16>, vector<8x32xbf16>, vector<1x8xf32> -> vector<1x8xf32>
    %c0_30 = arith.constant 0 : index
    %112 = memref.load %arg10[%c0_30] : memref<1xf32, #tpu.memory_space<smem>>
    %113 = vector.broadcast %112 : f32 to vector<1x8xf32>
    %114 = arith.addf %111, %113 : vector<1x8xf32>
    %c0_31 = arith.constant 0 : index
    %c0_32 = arith.constant 0 : index
    %c0_33 = arith.constant 0 : index
    %115 = vector.load %arg3[%c0_31, %c0_32, %c0_33] : memref<1x1x8xf32, #tpu.memory_space<vmem>>, vector<1x1x8xf32>
    %116 = vector.shape_cast %115 : vector<1x1x8xf32> to vector<1x8xf32>
    %117 = arith.mulf %114, %116 : vector<1x8xf32>
    %c0_34 = arith.constant 0 : index
    %c0_35 = arith.constant 0 : index
    %c0_36 = arith.constant 0 : index
    %118 = vector.load %arg11[%c0_34, %c0_35, %c0_36] : memref<1x1x8xf32, #tpu.memory_space<vmem>>, vector<1x1x8xf32>
    %119 = vector.shape_cast %118 : vector<1x1x8xf32> to vector<1x8xf32>
    %120 = vector.shape_cast %117 : vector<1x8xf32> to vector<1x1x8xf32>
    tpu.vector_store %arg11[%c0_34, %c0_35, %c0_36], %120 {strides = array<i32>} : memref<1x1x8xf32, #tpu.memory_space<vmem>>, vector<1x1x8xf32>,
    return
  }
  func.func @transform_0(%arg0: i32) -> (i32, i32) {
    %c0_i32 = arith.constant 0 : i32
    %c0_i32_0 = arith.constant 0 : i32
    return %arg0, %c0_i32 : i32, i32
  }
  func.func @transform_1(%arg0: i32) -> (i32, i32) {
    %c0_i32 = arith.constant 0 : i32
    %c0_i32_0 = arith.constant 0 : i32
    return %arg0, %c0_i32 : i32, i32
  }
  func.func @transform_2(%arg0: i32) -> (i32, i32, i32) {
    %c0_i32 = arith.constant 0 : i32
    %c0_i32_0 = arith.constant 0 : i32
    %c0_i32_1 = arith.constant 0 : i32
    return %arg0, %c0_i32, %c0_i32_0 : i32, i32, i32
  }
  func.func @transform_3(%arg0: i32) -> (i32, i32) {
    %c0_i32 = arith.constant 0 : i32
    %c0_i32_0 = arith.constant 0 : i32
    %c0_i32_1 = arith.constant 0 : i32
    return %c0_i32, %c0_i32_0 : i32, i32
  }
  func.func @transform_4(%arg0: i32) -> (i32, i32) {
    %c0_i32 = arith.constant 0 : i32
    %c0_i32_0 = arith.constant 0 : i32
    %c0_i32_1 = arith.constant 0 : i32
    return %c0_i32, %c0_i32_0 : i32, i32
  }
  func.func @transform_5(%arg0: i32) -> (i32, i32) {
    %c0_i32 = arith.constant 0 : i32
    %c0_i32_0 = arith.constant 0 : i32
    %c0_i32_1 = arith.constant 0 : i32
    return %c0_i32, %c0_i32_0 : i32, i32
  }
  func.func @transform_6(%arg0: i32) -> (i32, i32) {
    %c0_i32 = arith.constant 0 : i32
    %c0_i32_0 = arith.constant 0 : i32
    %c0_i32_1 = arith.constant 0 : i32
    return %c0_i32, %c0_i32_0 : i32, i32
  }
  func.func @transform_7(%arg0: i32) -> (i32, i32) {
    %c0_i32 = arith.constant 0 : i32
    %c0_i32_0 = arith.constant 0 : i32
    %c0_i32_1 = arith.constant 0 : i32
    return %c0_i32, %c0_i32_0 : i32, i32
  }
  func.func @transform_8(%arg0: i32) -> (i32, i32) {
    %c0_i32 = arith.constant 0 : i32
    %c0_i32_0 = arith.constant 0 : i32
    %c0_i32_1 = arith.constant 0 : i32
    return %c0_i32, %c0_i32_0 : i32, i32
  }
  func.func @transform_9(%arg0: i32) -> i32 {
    %c0_i32 = arith.constant 0 : i32
    %c0_i32_0 = arith.constant 0 : i32
    return %c0_i32 : i32
  }
  func.func @transform_10(%arg0: i32) -> (i32, i32, i32) {
    %c0_i32 = arith.constant 0 : i32
    %c0_i32_0 = arith.constant 0 : i32
    %c0_i32_1 = arith.constant 0 : i32
    return %arg0, %c0_i32, %c0_i32_0 : i32, i32, i32
  }
}

</mosaic_0001>

<llo_original>
// kernel: tpu_custom_call.1
$region0: #{tpu_custom_call.1}
  #allocation0 [shape = 'u32[]', space=smem, size = 0x4, offset = 0x4, fixed_abs, tag = 'smem constant byte address 0x4 - core index']
  #allocation1 [shape = 'u32[144,128]{1,0:T(1,128)}', space=vmem, size = 0x12000, scoped, tag = 'internal scratch']
  #allocation2 [shape = 'f32[1]{0:T(128)S(6)}', space=smem, size = 0x200, scoped, tag = 'scoped memory for tpu_custom_call.1']
  %s0 = inlined_call_operand.vmem [shape: s32[16,8], index: 0, kind: input, shape index: {}]
  %s1 = inlined_call_operand.vmem [shape: f32[16,8], index: 1, kind: input, shape index: {}]
  %s2 = inlined_call_operand.vmem [shape: f32[2,1,8], index: 2, kind: input, shape index: {}]
  %s3 = inlined_call_operand.vmem [shape: bf16[100,32], index: 3, kind: input, shape index: {}]
  %s4 = inlined_call_operand.vmem [shape: bf16[32,32], index: 4, kind: input, shape index: {}]
  %s5 = inlined_call_operand.vmem [shape: f32[1,32], index: 5, kind: input, shape index: {}]
  %s6 = inlined_call_operand.vmem [shape: bf16[32,32], index: 6, kind: input, shape index: {}]
  %s7 = inlined_call_operand.vmem [shape: f32[1,32], index: 7, kind: input, shape index: {}]
  %s8 = inlined_call_operand.vmem [shape: bf16[1,32], index: 8, kind: input, shape index: {}]
  %s9 = inlined_call_operand.<no memory space> [shape: f32[1], index: 9, kind: input, shape index: {}]
  %s10 = inlined_call_operand.hbm [shape: f32[2,1,8], index: 10, kind: output, shape index: {}]
  %s11 = sld [smem:[#allocation0]]
  $region73: #{tpu_custom_call.1} parent=0
    _
  %s13 = ssub.s32 1, %s11
  %s14 = scalar_select 0, %s13, %s11
  %15 = sst [smem:[#allocation2]] %s9
  $region1: #{tpu_custom_call.1} parent=0
    #allocation3 [shape = 'u8[1024]{0}', space=vmem, size = 0x400, scoped, tag = 'output window, operand 0']
    #allocation4 [shape = 's32[2]{0}', space=sflag, size = 0x8, scoped, tag = 'scoped memory for tpu_custom_call.1']
    %16 = vsyncpa [#allocation4], 0
    %s17 = scalar_lea.sflag [#allocation4], 1
    %18 = vsyncpa %s17, 0
    loop: start=0, step=1, limit=4
    $region2: #{tpu_custom_call.1} parent=1 // loop_pre_header
      _
    $region3: #{tpu_custom_call.1} parent=1 // loop_header
      %s20 = sphi 0, %s24
      %p21 = scmp.ge.s32.totalorder %s20, 4
      %s30 = sphi 0, %s32
      %s33 = sphi 0, %s30
      %s34 = sphi 0, %s33
      %s50 = sphi 0, %s34
      %s56 = sphi 0, %s58
      %s59 = sphi 0, %s56
      %s60 = sphi 0, %s59
      %s76 = sphi 0, %s60
      %s82 = sphi 0, %s84
      %s85 = sphi 0, %s82
      %s86 = sphi 0, %s85
      %s102 = sphi 0, %s86
      %s106 = sphi 0, %s106
      %s108 = sphi 0, %s106
      %s109 = sphi 0, %s108
      %s123 = sphi 0, %s109
      %s127 = sphi 0, %s127
      %s129 = sphi 0, %s127
      %s130 = sphi 0, %s129
      %s144 = sphi 0, %s130
      %s148 = sphi 0, %s148
      %s150 = sphi 0, %s148
      %s151 = sphi 0, %s150
      %s165 = sphi 0, %s151
      %s169 = sphi 0, %s169
      %s171 = sphi 0, %s169
      %s172 = sphi 0, %s171
      %s186 = sphi 0, %s172
      %s190 = sphi 0, %s190
      %s192 = sphi 0, %s190
      %s193 = sphi 0, %s192
      %s207 = sphi 0, %s193
      %s211 = sphi 0, %s211
      %s213 = sphi 0, %s211
      %s214 = sphi 0, %s213
      %s228 = sphi 0, %s214
      %s232 = sphi 0, %s232
      %s234 = sphi 0, %s232
      %s235 = sphi 0, %s234
      %s249 = sphi 0, %s235
      %s255 = sphi 0, %s257
      %s258 = sphi 0, %s255
      %s259 = sphi 0, %s258
      %s275 = sphi 0, %s259
    $region4: #{tpu_custom_call.1} parent=1 // loop_header_branch
      %23 = sbr.rel (%p21) target = $region8
    $region5: #{tpu_custom_call.1} parent=1 // loop_body
      %s25 = ssub.s32 %s20, 1
      %s26 = ssub.s32 %s20, 2
      %s27 = sadd.s32 %s20, 1
      %s28 = ssub.s32 %s20, %s27
      %p29 = scmp.eq.s32.totalorder %s28, 0
      %s31 = sadd.s32 %s30, 1
      %s32 = scalar_select %p29, %s30, %s31
      %p35 = pneg %p29
      %p36 = scmp.eq.s32.totalorder %s20, 1
      %p37 = por %p35, %p36
      %p38 = scmp.ne.s32.totalorder %s30, %s33
      %p39 = scmp.eq.s32.totalorder %s20, 0
      %p40 = por %p38, %p39
      %p41 = scmp.ne.s32.totalorder %s30, %s33
      %p42 = scmp.eq.s32.totalorder %s25, 1
      %p43 = por %p41, %p42
      %p44 = scmp.ne.s32.totalorder %s33, %s34
      %p45 = scmp.eq.s32.totalorder %s25, 0
      %p46 = por %p44, %p45
      %p47 = scmp.ne.s32.totalorder %s33, %s34
      %p48 = scmp.eq.s32.totalorder %s26, 1
      %p49 = por %p47, %p48
      %p51 = scmp.ne.s32.totalorder %s34, %s50
      %p52 = scmp.eq.s32.totalorder %s26, 0
      %p53 = por %p51, %p52
      %s54 = ssub.s32 %s20, %s27
      %p55 = scmp.eq.s32.totalorder %s54, 0
      %s57 = sadd.s32 %s56, 1
      %s58 = scalar_select %p55, %s56, %s57
      %p61 = pneg %p55
      %p62 = scmp.eq.s32.totalorder %s20, 1
      %p63 = por %p61, %p62
      %p64 = scmp.ne.s32.totalorder %s56, %s59
      %p65 = scmp.eq.s32.totalorder %s20, 0
      %p66 = por %p64, %p65
      %p67 = scmp.ne.s32.totalorder %s56, %s59
      %p68 = scmp.eq.s32.totalorder %s25, 1
      %p69 = por %p67, %p68
      %p70 = scmp.ne.s32.totalorder %s59, %s60
      %p71 = scmp.eq.s32.totalorder %s25, 0
      %p72 = por %p70, %p71
      %p73 = scmp.ne.s32.totalorder %s59, %s60
      %p74 = scmp.eq.s32.totalorder %s26, 1
      %p75 = por %p73, %p74
      %p77 = scmp.ne.s32.totalorder %s60, %s76
      %p78 = scmp.eq.s32.totalorder %s26, 0
      %p79 = por %p77, %p78
      %s80 = ssub.s32 %s20, %s27
      %p81 = scmp.eq.s32.totalorder %s80, 0
      %s83 = sadd.s32 %s82, 1
      %s84 = scalar_select %p81, %s82, %s83
      %p87 = pneg %p81
      %p88 = scmp.eq.s32.totalorder %s20, 1
      %p89 = por %p87, %p88
      %p90 = scmp.ne.s32.totalorder %s82, %s85
      %p91 = scmp.eq.s32.totalorder %s20, 0
      %p92 = por %p90, %p91
      %p93 = scmp.ne.s32.totalorder %s82, %s85
      %p94 = scmp.eq.s32.totalorder %s25, 1
      %p95 = por %p93, %p94
      %p96 = scmp.ne.s32.totalorder %s85, %s86
      %p97 = scmp.eq.s32.totalorder %s25, 0
      %p98 = por %p96, %p97
      %p99 = scmp.ne.s32.totalorder %s85, %s86
      %p100 = scmp.eq.s32.totalorder %s26, 1
      %p101 = por %p99, %p100
      %p103 = scmp.ne.s32.totalorder %s86, %s102
      %p104 = scmp.eq.s32.totalorder %s26, 0
      %p105 = por %p103, %p104
      %s107 = sadd.s32 %s106, 1
      %p110 = scmp.eq.s32.totalorder %s20, 1
      %p111 = scmp.ne.s32.totalorder %s106, %s108
      %p112 = scmp.eq.s32.totalorder %s20, 0
      %p113 = por %p111, %p112
      %p114 = scmp.ne.s32.totalorder %s106, %s108
      %p115 = scmp.eq.s32.totalorder %s25, 1
      %p116 = por %p114, %p115
      %p117 = scmp.ne.s32.totalorder %s108, %s109
      %p118 = scmp.eq.s32.totalorder %s25, 0
      %p119 = por %p117, %p118
      %p120 = scmp.ne.s32.totalorder %s108, %s109
      %p121 = scmp.eq.s32.totalorder %s26, 1
      %p122 = por %p120, %p121
      %p124 = scmp.ne.s32.totalorder %s109, %s123
      %p125 = scmp.eq.s32.totalorder %s26, 0
      %p126 = por %p124, %p125
      %s128 = sadd.s32 %s127, 1
      %p131 = scmp.eq.s32.totalorder %s20, 1
      %p132 = scmp.ne.s32.totalorder %s127, %s129
      %p133 = scmp.eq.s32.totalorder %s20, 0
      %p134 = por %p132, %p133
      %p135 = scmp.ne.s32.totalorder %s127, %s129
      %p136 = scmp.eq.s32.totalorder %s25, 1
      %p137 = por %p135, %p136
      %p138 = scmp.ne.s32.totalorder %s129, %s130
      %p139 = scmp.eq.s32.totalorder %s25, 0
      %p140 = por %p138, %p139
      %p141 = scmp.ne.s32.totalorder %s129, %s130
      %p142 = scmp.eq.s32.totalorder %s26, 1
      %p143 = por %p141, %p142
      %p145 = scmp.ne.s32.totalorder %s130, %s144
      %p146 = scmp.eq.s32.totalorder %s26, 0
      %p147 = por %p145, %p146
      %s149 = sadd.s32 %s148, 1
      %p152 = scmp.eq.s32.totalorder %s20, 1
      %p153 = scmp.ne.s32.totalorder %s148, %s150
      %p154 = scmp.eq.s32.totalorder %s20, 0
      %p155 = por %p153, %p154
      %p156 = scmp.ne.s32.totalorder %s148, %s150
      %p157 = scmp.eq.s32.totalorder %s25, 1
      %p158 = por %p156, %p157
      %p159 = scmp.ne.s32.totalorder %s150, %s151
      %p160 = scmp.eq.s32.totalorder %s25, 0
      %p161 = por %p159, %p160
      %p162 = scmp.ne.s32.totalorder %s150, %s151
      %p163 = scmp.eq.s32.totalorder %s26, 1
      %p164 = por %p162, %p163
      %p166 = scmp.ne.s32.totalorder %s151, %s165
      %p167 = scmp.eq.s32.totalorder %s26, 0
      %p168 = por %p166, %p167
      %s170 = sadd.s32 %s169, 1
      %p173 = scmp.eq.s32.totalorder %s20, 1
      %p174 = scmp.ne.s32.totalorder %s169, %s171
      %p175 = scmp.eq.s32.totalorder %s20, 0
      %p176 = por %p174, %p175
      %p177 = scmp.ne.s32.totalorder %s169, %s171
      %p178 = scmp.eq.s32.totalorder %s25, 1
      %p179 = por %p177, %p178
      %p180 = scmp.ne.s32.totalorder %s171, %s172
      %p181 = scmp.eq.s32.totalorder %s25, 0
      %p182 = por %p180, %p181
      %p183 = scmp.ne.s32.totalorder %s171, %s172
      %p184 = scmp.eq.s32.totalorder %s26, 1
      %p185 = por %p183, %p184
      %p187 = scmp.ne.s32.totalorder %s172, %s186
      %p188 = scmp.eq.s32.totalorder %s26, 0
      %p189 = por %p187, %p188
      %s191 = sadd.s32 %s190, 1
      %p194 = scmp.eq.s32.totalorder %s20, 1
      %p195 = scmp.ne.s32.totalorder %s190, %s192
      %p196 = scmp.eq.s32.totalorder %s20, 0
      %p197 = por %p195, %p196
      %p198 = scmp.ne.s32.totalorder %s190, %s192
      %p199 = scmp.eq.s32.totalorder %s25, 1
      %p200 = por %p198, %p199
      %p201 = scmp.ne.s32.totalorder %s192, %s193
      %p202 = scmp.eq.s32.totalorder %s25, 0
      %p203 = por %p201, %p202
      %p204 = scmp.ne.s32.totalorder %s192, %s193
      %p205 = scmp.eq.s32.totalorder %s26, 1
      %p206 = por %p204, %p205
      %p208 = scmp.ne.s32.totalorder %s193, %s207
      %p209 = scmp.eq.s32.totalorder %s26, 0
      %p210 = por %p208, %p209
      %s212 = sadd.s32 %s211, 1
      %p215 = scmp.eq.s32.totalorder %s20, 1
      %p216 = scmp.ne.s32.totalorder %s211, %s213
      %p217 = scmp.eq.s32.totalorder %s20, 0
      %p218 = por %p216, %p217
      %p219 = scmp.ne.s32.totalorder %s211, %s213
      %p220 = scmp.eq.s32.totalorder %s25, 1
      %p221 = por %p219, %p220
      %p222 = scmp.ne.s32.totalorder %s213, %s214
      %p223 = scmp.eq.s32.totalorder %s25, 0
      %p224 = por %p222, %p223
      %p225 = scmp.ne.s32.totalorder %s213, %s214
      %p226 = scmp.eq.s32.totalorder %s26, 1
      %p227 = por %p225, %p226
      %p229 = scmp.ne.s32.totalorder %s214, %s228
      %p230 = scmp.eq.s32.totalorder %s26, 0
      %p231 = por %p229, %p230
      %s233 = sadd.s32 %s232, 1
      %p236 = scmp.eq.s32.totalorder %s20, 1
      %p237 = scmp.ne.s32.totalorder %s232, %s234
      %p238 = scmp.eq.s32.totalorder %s20, 0
      %p239 = por %p237, %p238
      %p240 = scmp.ne.s32.totalorder %s232, %s234
      %p241 = scmp.eq.s32.totalorder %s25, 1
      %p242 = por %p240, %p241
      %p243 = scmp.ne.s32.totalorder %s234, %s235
      %p244 = scmp.eq.s32.totalorder %s25, 0
      %p245 = por %p243, %p244
      %p246 = scmp.ne.s32.totalorder %s234, %s235
      %p247 = scmp.eq.s32.totalorder %s26, 1
      %p248 = por %p246, %p247
      %p250 = scmp.ne.s32.totalorder %s235, %s249
      %p251 = scmp.eq.s32.totalorder %s26, 0
      %p252 = por %p250, %p251
      %s253 = ssub.s32 %s20, %s27
      %p254 = scmp.eq.s32.totalorder %s253, 0
      %s256 = sadd.s32 %s255, 1
      %s257 = scalar_select %p254, %s255, %s256
      %p260 = pneg %p254
      %p261 = scmp.eq.s32.totalorder %s20, 1
      %p262 = por %p260, %p261
      %p263 = scmp.ne.s32.totalorder %s255, %s258
      %p264 = scmp.eq.s32.totalorder %s20, 0
      %p265 = por %p263, %p264
      %p266 = scmp.ne.s32.totalorder %s255, %s258
      %p267 = scmp.eq.s32.totalorder %s25, 1
      %p268 = por %p266, %p267
      %p269 = scmp.ne.s32.totalorder %s258, %s259
      %p270 = scmp.eq.s32.totalorder %s25, 0
      %p271 = por %p269, %p270
      %p272 = scmp.ne.s32.totalorder %s258, %s259
      %p273 = scmp.eq.s32.totalorder %s26, 1
      %p274 = por %p272, %p273
      %p276 = scmp.ne.s32.totalorder %s259, %s275
      %p277 = scmp.eq.s32.totalorder %s26, 0
      %p278 = por %p276, %p277
      %p279 = scmp.le.s32.totalorder 1, %s20
      %p280 = scmp.lt.s32.totalorder %s20, 3
      %p281 = pnand %p279, %p280
      %p282 = pneg %p281
      // Predicated region
      $region9: #{tpu_custom_call.1} parent=5 // pred_check
        _
      $region10: #{tpu_custom_call.1} parent=5 // pred_check_branch
        %284 = sbr.rel (%p281) target = $region12
      $region11: #{tpu_custom_call.1} parent=5 // pred_region
        %s285 = ssub.s32 %s20, 1
        // Predicated region
        $region13: #{tpu_custom_call.1} parent=11 // pred_check
          %p286 = pneg %p119
        $region14: #{tpu_custom_call.1} parent=11 // pred_check_branch
          %288 = sbr.rel (%p286) target = $region16
        $region15: #{tpu_custom_call.1} parent=11 // pred_region
          _
        $region16: #{tpu_custom_call.1} parent=11 // pred_fallthru
          _
        // Predicated region
        $region17: #{tpu_custom_call.1} parent=11 // pred_check
          %p289 = pneg %p140
        $region18: #{tpu_custom_call.1} parent=11 // pred_check_branch
          %291 = sbr.rel (%p289) target = $region20
        $region19: #{tpu_custom_call.1} parent=11 // pred_region
          _
        $region20: #{tpu_custom_call.1} parent=11 // pred_fallthru
          _
        // Predicated region
        $region21: #{tpu_custom_call.1} parent=11 // pred_check
          %p292 = pneg %p161
        $region22: #{tpu_custom_call.1} parent=11 // pred_check_branch
          %294 = sbr.rel (%p292) target = $region24
        $region23: #{tpu_custom_call.1} parent=11 // pred_region
          _
        $region24: #{tpu_custom_call.1} parent=11 // pred_fallthru
          _
        // Predicated region
        $region25: #{tpu_custom_call.1} parent=11 // pred_check
          %p295 = pneg %p182
        $region26: #{tpu_custom_call.1} parent=11 // pred_check_branch
          %297 = sbr.rel (%p295) target = $region28
        $region27: #{tpu_custom_call.1} parent=11 // pred_region
          _
        $region28: #{tpu_custom_call.1} parent=11 // pred_fallthru
          _
        // Predicated region
        $region29: #{tpu_custom_call.1} parent=11 // pred_check
          %p298 = pneg %p203
        $region30: #{tpu_custom_call.1} parent=11 // pred_check_branch
          %300 = sbr.rel (%p298) target = $region32
        $region31: #{tpu_custom_call.1} parent=11 // pred_region
          _
        $region32: #{tpu_custom_call.1} parent=11 // pred_fallthru
          _
        // Predicated region
        $region33: #{tpu_custom_call.1} parent=11 // pred_check
          %p301 = pneg %p224
        $region34: #{tpu_custom_call.1} parent=11 // pred_check_branch
          %303 = sbr.rel (%p301) target = $region36
        $region35: #{tpu_custom_call.1} parent=11 // pred_region
          _
        $region36: #{tpu_custom_call.1} parent=11 // pred_fallthru
          _
        // Predicated region
        $region37: #{tpu_custom_call.1} parent=11 // pred_check
          %p304 = pneg %p245
        $region38: #{tpu_custom_call.1} parent=11 // pred_check_branch
          %306 = sbr.rel (%p304) target = $region40
        $region39: #{tpu_custom_call.1} parent=11 // pred_region
          _
        $region40: #{tpu_custom_call.1} parent=11 // pred_fallthru
          _
      $region12: #{tpu_custom_call.1} parent=5 // pred_fallthru
        _
      %p307 = scmp.lt.s32.totalorder %s20, 2
      // Predicated region
      $region41: #{tpu_custom_call.1} parent=5 // pred_check
        %p308 = pneg %p307
      $region42: #{tpu_custom_call.1} parent=5 // pred_check_branch
        %310 = sbr.rel (%p308) target = $region44
      $region43: #{tpu_custom_call.1} parent=5 // pred_region
        // Predicated region
        $region45: #{tpu_custom_call.1} parent=43 // pred_check
          %p311 = pneg %p40
        $region46: #{tpu_custom_call.1} parent=43 // pred_check_branch
          %313 = sbr.rel (%p311) target = $region48
        $region47: #{tpu_custom_call.1} parent=43 // pred_region
          %p314 = scmp.lt.s32.totalorder %s20, 1
          %s315 = scalar_select %p314, %s20, 1
          %s316 = smul.addr %s315, 8
          %s317 = scalar_lea.vmem %s0, %s316
        $region48: #{tpu_custom_call.1} parent=43 // pred_fallthru
          _
        // Predicated region
        $region49: #{tpu_custom_call.1} parent=43 // pred_check
          %p318 = pneg %p66
        $region50: #{tpu_custom_call.1} parent=43 // pred_check_branch
          %320 = sbr.rel (%p318) target = $region52
        $region51: #{tpu_custom_call.1} parent=43 // pred_region
          %p321 = scmp.lt.s32.totalorder %s20, 1
          %s322 = scalar_select %p321, %s20, 1
          %s323 = smul.addr %s322, 8
          %s324 = scalar_lea.vmem %s1, %s323
        $region52: #{tpu_custom_call.1} parent=43 // pred_fallthru
          _
        // Predicated region
        $region53: #{tpu_custom_call.1} parent=43 // pred_check
          %p325 = pneg %p92
        $region54: #{tpu_custom_call.1} parent=43 // pred_check_branch
          %327 = sbr.rel (%p325) target = $region56
        $region55: #{tpu_custom_call.1} parent=43 // pred_region
          %p328 = scmp.lt.s32.totalorder %s20, 1
          %s329 = scalar_select %p328, %s20, 1
          %s330 = scalar_lea.vmem %s2, %s329
        $region56: #{tpu_custom_call.1} parent=43 // pred_fallthru
          _
      $region44: #{tpu_custom_call.1} parent=5 // pred_fallthru
        _
      %p331 = scmp.le.s32.totalorder 1, %s20
      %p332 = scmp.lt.s32.totalorder %s20, 3
      %p333 = pnand %p331, %p332
      %p334 = pneg %p333
      // Predicated region
      $region57: #{tpu_custom_call.1} parent=5 // pred_check
        _
      $region58: #{tpu_custom_call.1} parent=5 // pred_check_branch
        %336 = sbr.rel (%p333) target = $region60
      $region59: #{tpu_custom_call.1} parent=5 // pred_region
        %s337 = ssub.s32 %s20, 1
        %p338 = scmp.lt.s32.totalorder %s25, 1
        %s339 = scalar_select %p338, %s25, 1
        %s340 = smul.addr %s339, 8
        %s341 = scalar_lea.vmem %s0, %s340
        %p342 = pneg %p46
        %p343 = pneg %p43
        %p344 = scmp.lt.s32.totalorder %s25, 1
        %s345 = scalar_select %p344, %s25, 1
        %s346 = smul.addr %s345, 8
        %s347 = scalar_lea.vmem %s1, %s346
        %p348 = pneg %p72
        %p349 = pneg %p69
        %p350 = scmp.lt.s32.totalorder %s25, 1
        %s351 = scalar_select %p350, %s25, 1
        %s352 = scalar_lea.vmem %s2, %s351
        %p353 = pneg %p98
        %p354 = pneg %p95
        %p355 = pneg %p119
        %p356 = pneg %p116
        %p357 = pneg %p140
        %p358 = pneg %p137
        %p359 = pneg %p161
        %p360 = pneg %p158
        %p361 = pneg %p182
        %p362 = pneg %p179
        %p363 = pneg %p203
        %p364 = pneg %p200
        %p365 = pneg %p224
        %p366 = pneg %p221
        %p367 = pneg %p245
        %p368 = pneg %p242
        %p369 = pneg %p271
        %p370 = pneg %p268
        %s371 = sand.u32 %s258, 1
        %s372 = scalar_lea.sflag [#allocation4], %s371
        %s373 = sand.u32 %s258, 1
        %s374 = scalar_lea.vmem [#allocation3], %s373
        %p375 = scmp.lt.s32.totalorder %s25, 1
        %s376 = scalar_select %p375, %s25, 1
        %s377 = smul.addr %s376, 8
        %s378 = scalar_lea.vmem %s0, %s377
        %p379 = scmp.lt.s32.totalorder %s25, 1
        %s380 = scalar_select %p379, %s25, 1
        %s381 = smul.addr %s380, 8
        %s382 = scalar_lea.vmem %s1, %s381
        %p383 = scmp.lt.s32.totalorder %s25, 1
        %s384 = scalar_select %p383, %s25, 1
        %s385 = scalar_lea.vmem %s2, %s384
        %v387 = vld [vmem:[%s378] sm:$0xff]
        %v388 = vld [vmem:[%s382] sm:$0xff]
        %vm389 = vcmask 64512
        %v390 = vsel %vm389, %v388, 0.0
        %391 = vadd.xlane.f32.xlu0 %v390
        %v392 = vpop.xlane.xlu0 %391
        %v393 = vmax.f32 %v392, 1.0
        %v394 = vrcp.pop %v393
        %v395 = vmul.f32 1.0, %v394
        %v396 = vmul.f32 %v388, %v395
        %v397 = vlaneseq
        %v398 = vand.u32 %v397, 127
        %399 = vset.pattern.permute.xlu0 0
        %400 = vperm.xlu0 %399, %v387
        %v401 = vpop.permute.xlu0 %400
        %vm402 = vcmp.eq.s32.totalorder %v401, %v398
        %404 = vset.pattern.permute.xlu0 0
        %405 = vperm.xlu0 %404, %v396
        %v406 = vpop.permute.xlu0 %405
        %v408 = vsel %vm402, %v406, 0.0
        %v409 = vadd.f32 %v408, 0.0
        %410 = vset.pattern.permute.xlu0 1
        %411 = vperm.xlu0 %410, %v387
        %v412 = vpop.permute.xlu0 %411
        %vm413 = vcmp.eq.s32.totalorder %v412, %v398
        %414 = vset.pattern.permute.xlu0 1
        %415 = vperm.xlu0 %414, %v396
        %v416 = vpop.permute.xlu0 %415
        %v418 = vsel %vm413, %v416, 0.0
        %v419 = vadd.f32 %v409, %v418
        %420 = vset.pattern.permute.xlu0 2
        %421 = vperm.xlu0 %420, %v387
        %v422 = vpop.permute.xlu0 %421
        %vm423 = vcmp.eq.s32.totalorder %v422, %v398
        %424 = vset.pattern.permute.xlu0 2
        %425 = vperm.xlu0 %424, %v396
        %v426 = vpop.permute.xlu0 %425
        %v428 = vsel %vm423, %v426, 0.0
        %v429 = vadd.f32 %v419, %v428
        %430 = vset.pattern.permute.xlu0 3
        %431 = vperm.xlu0 %430, %v387
        %v432 = vpop.permute.xlu0 %431
        %vm433 = vcmp.eq.s32.totalorder %v432, %v398
        %434 = vset.pattern.permute.xlu0 3
        %435 = vperm.xlu0 %434, %v396
        %v436 = vpop.permute.xlu0 %435
        %v438 = vsel %vm433, %v436, 0.0
        %v439 = vadd.f32 %v429, %v438
        %440 = vset.pattern.permute.xlu0 4
        %441 = vperm.xlu0 %440, %v387
        %v442 = vpop.permute.xlu0 %441
        %vm443 = vcmp.eq.s32.totalorder %v442, %v398
        %444 = vset.pattern.permute.xlu0 4
        %445 = vperm.xlu0 %444, %v396
        %v446 = vpop.permute.xlu0 %445
        %v448 = vsel %vm443, %v446, 0.0
        %v449 = vadd.f32 %v439, %v448
        %450 = vset.pattern.permute.xlu0 5
        %451 = vperm.xlu0 %450, %v387
        %v452 = vpop.permute.xlu0 %451
        %vm453 = vcmp.eq.s32.totalorder %v452, %v398
        %454 = vset.pattern.permute.xlu0 5
        %455 = vperm.xlu0 %454, %v396
        %v456 = vpop.permute.xlu0 %455
        %v458 = vsel %vm453, %v456, 0.0
        %v459 = vadd.f32 %v449, %v458
        %460 = vset.pattern.permute.xlu0 6
        %461 = vperm.xlu0 %460, %v387
        %v462 = vpop.permute.xlu0 %461
        %vm463 = vcmp.eq.s32.totalorder %v462, %v398
        %464 = vset.pattern.permute.xlu0 6
        %465 = vperm.xlu0 %464, %v396
        %v466 = vpop.permute.xlu0 %465
        %v468 = vsel %vm463, %v466, 0.0
        %v469 = vadd.f32 %v459, %v468
        %470 = vset.pattern.permute.xlu0 7
        %471 = vperm.xlu0 %470, %v387
        %v472 = vpop.permute.xlu0 %471
        %vm473 = vcmp.eq.s32.totalorder %v472, %v398
        %474 = vset.pattern.permute.xlu0 7
        %475 = vperm.xlu0 %474, %v396
        %v476 = vpop.permute.xlu0 %475
        %v478 = vsel %vm473, %v476, 0.0
        %v479 = vadd.f32 %v469, %v478
        %v480 = vpack.c.bf16 %v479, %v479
        %v481 = vld [vmem:[%s3] sm:$0xf]
        %v482 = vld [vmem:[%s3 + $0x4] sm:$0xf]
        %v483 = vld [vmem:[%s3 + $0x8] sm:$0xf]
        %v484 = vld [vmem:[%s3 + $0xc] sm:$0xf]
        %v485 = vld [vmem:[%s3 + $0x10] sm:$0xf]
        %v486 = vld [vmem:[%s3 + $0x14] sm:$0xf]
        %v487 = vld [vmem:[%s3 + $0x18] sm:$0xf]
        %v488 = vld [vmem:[%s3 + $0x1c] sm:$0xf]
        %v489 = vld [vmem:[%s3 + $0x20] sm:$0xf]
        %v490 = vld [vmem:[%s3 + $0x24] sm:$0xf]
        %v491 = vld [vmem:[%s3 + $0x28] sm:$0xf]
        %v492 = vld [vmem:[%s3 + $0x2c] sm:$0xf]
        %v493 = vld [vmem:[%s3 + $0x30] sm:$0x3]
        %v507 = vunpack.c.l.b16 %v481
        %v508 = vunpack.c.l.b16 %v482
        %v509 = vunpack.c.l.b16 %v483
        %v510 = vunpack.c.l.b16 %v484
        %v511 = vunpack.c.l.b16 %v485
        %v512 = vunpack.c.l.b16 %v486
        %v513 = vunpack.c.l.b16 %v487
        %v514 = vunpack.c.l.b16 %v488
        %v515 = vunpack.c.l.b16 %v489
        %v516 = vunpack.c.l.b16 %v490
        %v517 = vunpack.c.l.b16 %v491
        %v518 = vunpack.c.l.b16 %v492
        %v519 = vunpack.c.l.b16 %v493
        %v520 = vpack.c.b16 %v508, %v507
        %v521 = vpack.c.b16 %v510, %v509
        %v522 = vpack.c.b16 %v512, %v511
        %v523 = vpack.c.b16 %v514, %v513
        %v524 = vpack.c.b16 %v516, %v515
        %v525 = vpack.c.b16 %v518, %v517
        %v526 = vpack.c.b16 %v519, %v519
        %vm533 = vcmask 818176
        %v535 = vsel %vm533, %v480, 0
        %vm537 = vcmask 1041408
        %v539 = vsel %vm537, %v526, 0
        %541 = vmatprep.subr.bf16.mxu0 0
        %542 = vmatpush1.bf16.msra.mxu0 %v520
        %543 = vmatprep.subr.bf16.mxu0 0
        %544 = vmatpush1.bf16.msra.mxu0 %v521
        %545 = vmatprep.subr.bf16.mxu0 0
        %546 = vmatpush1.bf16.msra.mxu0 %v522
        %547 = vmatprep.subr.bf16.mxu0 0
        %548 = vmatpush1.bf16.msra.mxu0 %v523
        %549 = vmatprep.subr.bf16.mxu0 0
        %550 = vmatpush1.bf16.msra.mxu0 %v524
        %551 = vmatprep.subr.bf16.mxu0 0
        %552 = vmatpush1.bf16.msra.mxu0 %v525
        %553 = vmatprep.subr.bf16.mxu0 0
        %554 = vmatpush1.bf16.msra.mxu0 %v539
        %555 = vmatprep.subr.bf16.mxu0 0
        %556 = vmatpush1.bf16.msra.mxu0 0
        %557 = vmatprep.subr.bf16.mxu0 0
        %558 = vmatpush1.bf16.msra.mxu0 0
        %559 = vmatprep.subr.bf16.mxu0 0
        %560 = vmatpush1.bf16.msra.mxu0 0
        %561 = vmatprep.subr.bf16.mxu0 0
        %562 = vmatpush1.bf16.msra.mxu0 0
        %563 = vmatprep.subr.bf16.mxu0 0
        %564 = vmatpush1.bf16.msra.mxu0 0
        %565 = vmatprep.subr.bf16.mxu0 0
        %566 = vmatpush1.bf16.msra.mxu0 0
        %567 = vmatprep.subr.bf16.mxu0 0
        %568 = vmatpush1.bf16.msra.mxu0 0
        %569 = vmatprep.subr.bf16.mxu0 0
        %570 = vmatpush1.bf16.msra.mxu0 0
        %571 = vmatprep.subr.bf16.mxu0 0
        %572 = vmatpush1.bf16.msra.mxu0 0
        %573 = vmatprep.mubr.bf16.mxu0 0
        %574 = vmatmul.mubr.bf16.gmra.mrb[0].mxu0 %v535
        %v575 = vpop.f32.mrb[0].mxu0
        %v576 = vadd.f32 0.0, %v575
        %v577 = vpop.f32.mrb[0].mxu0
        %v578 = vpop.f32.mrb[0].mxu0
        %v579 = vpop.f32.mrb[0].mxu0
        %580 = vdwg.mxu0
        %v581 = vpack.c.bf16 %v576, %v576
        %v582 = vld [vmem:[%s4] sm:$0xf]
        %v583 = vld [vmem:[%s4 + $0x4] sm:$0xf]
        %v584 = vld [vmem:[%s4 + $0x8] sm:$0xf]
        %v585 = vld [vmem:[%s4 + $0xc] sm:$0xf]
        %v586 = vld [vmem:[%s5] sm:$0x1]
        %v588 = vlaneseq
        %v589 = vshrl.u32 %v588, 7
        %v590 = vsub.s32 0, %v589
        %v591 = vrot.slane %v586, %v590
        %v597 = vunpack.c.l.b16 %v582
        %v598 = vunpack.c.l.b16 %v583
        %v599 = vunpack.c.l.b16 %v584
        %v600 = vunpack.c.l.b16 %v585
        %v601 = vpack.c.b16 %v598, %v597
        %v602 = vpack.c.b16 %v600, %v599
        %vm605 = vcmask 261120
        %v607 = vsel %vm605, %v581, 0
        %609 = vmatprep.subr.bf16.mxu0 0
        %610 = vmatpush1.bf16.msra.mxu0 %v601
        %611 = vmatprep.subr.bf16.mxu0 0
        %612 = vmatpush1.bf16.msra.mxu0 %v602
        %613 = vmatprep.subr.bf16.mxu0 0
        %614 = vmatpush1.bf16.msra.mxu0 0
        %615 = vmatprep.subr.bf16.mxu0 0
        %616 = vmatpush1.bf16.msra.mxu0 0
        %617 = vmatprep.subr.bf16.mxu0 0
        %618 = vmatpush1.bf16.msra.mxu0 0
        %619 = vmatprep.subr.bf16.mxu0 0
        %620 = vmatpush1.bf16.msra.mxu0 0
        %621 = vmatprep.subr.bf16.mxu0 0
        %622 = vmatpush1.bf16.msra.mxu0 0
        %623 = vmatprep.subr.bf16.mxu0 0
        %624 = vmatpush1.bf16.msra.mxu0 0
        %625 = vmatprep.subr.bf16.mxu0 0
        %626 = vmatpush1.bf16.msra.mxu0 0
        %627 = vmatprep.subr.bf16.mxu0 0
        %628 = vmatpush1.bf16.msra.mxu0 0
        %629 = vmatprep.subr.bf16.mxu0 0
        %630 = vmatpush1.bf16.msra.mxu0 0
        %631 = vmatprep.subr.bf16.mxu0 0
        %632 = vmatpush1.bf16.msra.mxu0 0
        %633 = vmatprep.subr.bf16.mxu0 0
        %634 = vmatpush1.bf16.msra.mxu0 0
        %635 = vmatprep.subr.bf16.mxu0 0
        %636 = vmatpush1.bf16.msra.mxu0 0
        %637 = vmatprep.subr.bf16.mxu0 0
        %638 = vmatpush1.bf16.msra.mxu0 0
        %639 = vmatprep.subr.bf16.mxu0 0
        %640 = vmatpush1.bf16.msra.mxu0 0
        %641 = vmatprep.mubr.bf16.mxu0 0
        %642 = vmatmul.mubr.bf16.gmra.mrb[0].mxu0 %v607
        %v643 = vpop.f32.mrb[0].mxu0
        %v644 = vadd.f32 %v591, %v643
        %v645 = vpop.f32.mrb[0].mxu0
        %v646 = vpop.f32.mrb[0].mxu0
        %v647 = vpop.f32.mrb[0].mxu0
        %648 = vdwg.mxu0
        %v649 = vtanh.pop %v644
        %v650 = vpack.c.bf16 %v649, %v649
        %v651 = vld [vmem:[%s6] sm:$0xf]
        %v652 = vld [vmem:[%s6 + $0x4] sm:$0xf]
        %v653 = vld [vmem:[%s6 + $0x8] sm:$0xf]
        %v654 = vld [vmem:[%s6 + $0xc] sm:$0xf]
        %v655 = vld [vmem:[%s7] sm:$0x1]
        %v657 = vlaneseq
        %v658 = vshrl.u32 %v657, 7
        %v659 = vsub.s32 0, %v658
        %v660 = vrot.slane %v655, %v659
        %v666 = vunpack.c.l.b16 %v651
        %v667 = vunpack.c.l.b16 %v652
        %v668 = vunpack.c.l.b16 %v653
        %v669 = vunpack.c.l.b16 %v654
        %v670 = vpack.c.b16 %v667, %v666
        %v671 = vpack.c.b16 %v669, %v668
        %v675 = vsel %vm605, %v650, 0
        %677 = vmatprep.subr.bf16.mxu0 0
        %678 = vmatpush1.bf16.msra.mxu0 %v670
        %679 = vmatprep.subr.bf16.mxu0 0
        %680 = vmatpush1.bf16.msra.mxu0 %v671
        %681 = vmatprep.subr.bf16.mxu0 0
        %682 = vmatpush1.bf16.msra.mxu0 0
        %683 = vmatprep.subr.bf16.mxu0 0
        %684 = vmatpush1.bf16.msra.mxu0 0
        %685 = vmatprep.subr.bf16.mxu0 0
        %686 = vmatpush1.bf16.msra.mxu0 0
        %687 = vmatprep.subr.bf16.mxu0 0
        %688 = vmatpush1.bf16.msra.mxu0 0
        %689 = vmatprep.subr.bf16.mxu0 0
        %690 = vmatpush1.bf16.msra.mxu0 0
        %691 = vmatprep.subr.bf16.mxu0 0
        %692 = vmatpush1.bf16.msra.mxu0 0
        %693 = vmatprep.subr.bf16.mxu0 0
        %694 = vmatpush1.bf16.msra.mxu0 0
        %695 = vmatprep.subr.bf16.mxu0 0
        %696 = vmatpush1.bf16.msra.mxu0 0
        %697 = vmatprep.subr.bf16.mxu0 0
        %698 = vmatpush1.bf16.msra.mxu0 0
        %699 = vmatprep.subr.bf16.mxu0 0
        %700 = vmatpush1.bf16.msra.mxu0 0
        %701 = vmatprep.subr.bf16.mxu0 0
        %702 = vmatpush1.bf16.msra.mxu0 0
        %703 = vmatprep.subr.bf16.mxu0 0
        %704 = vmatpush1.bf16.msra.mxu0 0
        %705 = vmatprep.subr.bf16.mxu0 0
        %706 = vmatpush1.bf16.msra.mxu0 0
        %707 = vmatprep.subr.bf16.mxu0 0
        %708 = vmatpush1.bf16.msra.mxu0 0
        %709 = vmatprep.mubr.bf16.mxu0 0
        %710 = vmatmul.mubr.bf16.gmra.mrb[0].mxu0 %v675
        %v711 = vpop.f32.mrb[0].mxu0
        %v712 = vadd.f32 %v660, %v711
        %v713 = vpop.f32.mrb[0].mxu0
        %v714 = vpop.f32.mrb[0].mxu0
        %v715 = vpop.f32.mrb[0].mxu0
        %716 = vdwg.mxu0
        %v717 = vtanh.pop %v712
        %v718 = vld [vmem:[%s8] sm:$0x1]
        %v719 = vpack.c.bf16 %v717, %v717
        %s720 = sld [smem:[#allocation2]]
        %v721 = vstv %s720
        %v723 = vsel %vm605, %v718, 0
        %v726 = vsel %vm605, %v719, 0
        %728 = vmatprep.subr.bf16.mxu0 0
        %729 = vmatpush1.bf16.xpose.msra.mxu0 %v726
        %730 = vmatprep.subr.bf16.mxu0 0
        %731 = vmatpush1.bf16.xpose.msra.mxu0 0
        %732 = vmatprep.subr.bf16.mxu0 0
        %733 = vmatpush1.bf16.xpose.msra.mxu0 0
        %734 = vmatprep.subr.bf16.mxu0 0
        %735 = vmatpush1.bf16.xpose.msra.mxu0 0
        %736 = vmatprep.subr.bf16.mxu0 0
        %737 = vmatpush1.bf16.xpose.msra.mxu0 0
        %738 = vmatprep.subr.bf16.mxu0 0
        %739 = vmatpush1.bf16.xpose.msra.mxu0 0
        %740 = vmatprep.subr.bf16.mxu0 0
        %741 = vmatpush1.bf16.xpose.msra.mxu0 0
        %742 = vmatprep.subr.bf16.mxu0 0
        %743 = vmatpush1.bf16.xpose.msra.mxu0 0
        %744 = vmatprep.subr.bf16.mxu0 0
        %745 = vmatpush1.bf16.xpose.msra.mxu0 0
        %746 = vmatprep.subr.bf16.mxu0 0
        %747 = vmatpush1.bf16.xpose.msra.mxu0 0
        %748 = vmatprep.subr.bf16.mxu0 0
        %749 = vmatpush1.bf16.xpose.msra.mxu0 0
        %750 = vmatprep.subr.bf16.mxu0 0
        %751 = vmatpush1.bf16.xpose.msra.mxu0 0
        %752 = vmatprep.subr.bf16.mxu0 0
        %753 = vmatpush1.bf16.xpose.msra.mxu0 0
        %754 = vmatprep.subr.bf16.mxu0 0
        %755 = vmatpush1.bf16.xpose.msra.mxu0 0
        %756 = vmatprep.subr.bf16.mxu0 0
        %757 = vmatpush1.bf16.xpose.msra.mxu0 0
        %758 = vmatprep.subr.bf16.mxu0 0
        %759 = vmatpush1.bf16.xpose.msra.mxu0 0
        %760 = vmatprep.mubr.bf16.mxu0 0
        %761 = vmatmul.mubr.bf16.gmra.mrb[0].mxu0 %v723
        %v762 = vpop.f32.mrb[0].mxu0
        %v763 = vadd.f32 %v721, %v762
        %v764 = vpop.f32.mrb[0].mxu0
        %v765 = vpop.f32.mrb[0].mxu0
        %v766 = vpop.f32.mrb[0].mxu0
        %767 = vdwg.mxu0
        %v768 = vld [vmem:[%s385] sm:$0x1]
        %v769 = vmul.f32 %v763, %v768
        %vm770 = vcmask 57344
        %771 = vst.msk [vmem:[%s374] sm:$0x1] %vm770, %v769
        %s772 = sand.u32 %s258, 1
        %s773 = scalar_lea.sflag [#allocation4], %s772
        %s774 = sand.u32 %s258, 1
        %s775 = scalar_lea.vmem [#allocation3], %s774
        // Predicated region
        $region61: #{tpu_custom_call.1} parent=59 // pred_check
          %p776 = pneg %p268
        $region62: #{tpu_custom_call.1} parent=59 // pred_check_branch
          %778 = sbr.rel (%p776) target = $region64
        $region63: #{tpu_custom_call.1} parent=59 // pred_region
          %s780 = ssub.s32 16, 16
          %781 = vsyncadd %s773, %s780
          %s782 = smul.addr %s25, 16
          %s783 = scalar_lea.hbm %s10, %s782
          %s785 = sshll.u32 %s775, 4
          %s786 = int_to_ptr.vmem [resolvable:$true] %s785
          %788 = dma.vmem_to_hbm [thread:$0]  %s786, 16, %s783, %s773
        $region64: #{tpu_custom_call.1} parent=59 // pred_fallthru
          _
      $region60: #{tpu_custom_call.1} parent=5 // pred_fallthru
        _
      %p789 = scmp.le.s32.totalorder 2, %s20
      // Predicated region
      $region65: #{tpu_custom_call.1} parent=5 // pred_check
        %p790 = pneg %p789
      $region66: #{tpu_custom_call.1} parent=5 // pred_check_branch
        %792 = sbr.rel (%p790) target = $region68
      $region67: #{tpu_custom_call.1} parent=5 // pred_region
        %s793 = ssub.s32 %s20, 2
        // Predicated region
        $region69: #{tpu_custom_call.1} parent=67 // pred_check
          %p794 = pneg %p274
        $region70: #{tpu_custom_call.1} parent=67 // pred_check_branch
          %796 = sbr.rel (%p794) target = $region72
        $region71: #{tpu_custom_call.1} parent=67 // pred_region
          %s797 = sand.u32 %s259, 1
          %s798 = scalar_lea.sflag [#allocation4], %s797
          %s799 = sand.u32 %s259, 1
          %s800 = scalar_lea.vmem [#allocation3], %s799
          %801 = dma.done %s798, 16
        $region72: #{tpu_custom_call.1} parent=67 // pred_fallthru
          _
      $region68: #{tpu_custom_call.1} parent=5 // pred_fallthru
        _
    $region6: #{tpu_custom_call.1} parent=1 // loop_footer
      %s24 = sadd.s32 1, %s20
    $region7: #{tpu_custom_call.1} parent=1 // loop_footer_branch
      %19 = sbr.rel target = $region3
    $region8: #{tpu_custom_call.1} parent=1 // loop_exit
      _
    %802 = vsyncpa [#allocation4], 1
    %s803 = scalar_lea.sflag [#allocation4], 1
    %804 = vsyncpa %s803, 1

// kernel: tpu_custom_call.1
$region0: #{tpu_custom_call.1}
  #allocation0 [shape = 'u32[]', space=smem, size = 0x4, offset = 0x4, fixed_abs, tag = 'smem constant byte address 0x4 - core index']
  #allocation1 [shape = 'u32[144,128]{1,0:T(1,128)}', space=vmem, size = 0x12000, scoped, tag = 'internal scratch']
  #allocation2 [shape = 'f32[1]{0:T(128)S(6)}', space=smem, size = 0x200, scoped, tag = 'scoped memory for tpu_custom_call.1']
  %s0 = inlined_call_operand.vmem [shape: s32[16,8], index: 0, kind: input, shape index: {}]
  %s1 = inlined_call_operand.vmem [shape: f32[16,8], index: 1, kind: input, shape index: {}]
  %s2 = inlined_call_operand.vmem [shape: f32[2,1,8], index: 2, kind: input, shape index: {}]
  %s3 = inlined_call_operand.vmem [shape: bf16[100,32], index: 3, kind: input, shape index: {}]
  %s4 = inlined_call_operand.vmem [shape: bf16[32,32], index: 4, kind: input, shape index: {}]
  %s5 = inlined_call_operand.vmem [shape: f32[1,32], index: 5, kind: input, shape index: {}]
  %s6 = inlined_call_operand.vmem [shape: bf16[32,32], index: 6, kind: input, shape index: {}]
  %s7 = inlined_call_operand.vmem [shape: f32[1,32], index: 7, kind: input, shape index: {}]
  %s8 = inlined_call_operand.vmem [shape: bf16[1,32], index: 8, kind: input, shape index: {}]
  %s9 = inlined_call_operand.<no memory space> [shape: f32[1], index: 9, kind: input, shape index: {}]
  %s10 = inlined_call_operand.hbm [shape: f32[2,1,8], index: 10, kind: output, shape index: {}]
  %s11 = sld [smem:[#allocation0]]
  $region73: #{tpu_custom_call.1} parent=0
    _
  %s13 = ssub.s32 1, %s11
  %s14 = scalar_select 0, %s13, %s11
  %15 = sst [smem:[#allocation2]] %s9
  $region1: #{tpu_custom_call.1} parent=0
    #allocation3 [shape = 'u8[1024]{0}', space=vmem, size = 0x400, scoped, tag = 'output window, operand 0']
    #allocation4 [shape = 's32[2]{0}', space=sflag, size = 0x8, scoped, tag = 'scoped memory for tpu_custom_call.1']
    %16 = vsyncpa [#allocation4], 0
    %s17 = scalar_lea.sflag [#allocation4], 1
    %18 = vsyncpa %s17, 0
    loop: start=0, step=1, limit=4
    $region2: #{tpu_custom_call.1} parent=1 // loop_pre_header
      _
    $region3: #{tpu_custom_call.1} parent=1 // loop_header
      %s20 = sphi 0, %s24
      %p21 = scmp.ge.s32.totalorder %s20, 4
      %s30 = sphi 0, %s32
      %s33 = sphi 0, %s30
      %s34 = sphi 0, %s33
      %s50 = sphi 0, %s34
      %s56 = sphi 0, %s58
      %s59 = sphi 0, %s56
      %s60 = sphi 0, %s59
      %s76 = sphi 0, %s60
      %s82 = sphi 0, %s84
      %s85 = sphi 0, %s82
      %s86 = sphi 0, %s85
      %s102 = sphi 0, %s86
      %s106 = sphi 0, %s106
      %s108 = sphi 0, %s106
      %s109 = sphi 0, %s108
      %s123 = sphi 0, %s109
      %s127 = sphi 0, %s127
      %s129 = sphi 0, %s127
      %s130 = sphi 0, %s129
      %s144 = sphi 0, %s130
      %s148 = sphi 0, %s148
      %s150 = sphi 0, %s148
      %s151 = sphi 0, %s150
      %s165 = sphi 0, %s151
      %s169 = sphi 0, %s169
      %s171 = sphi 0, %s169
      %s172 = sphi 0, %s171
      %s186 = sphi 0, %s172
      %s190 = sphi 0, %s190
      %s192 = sphi 0, %s190
      %s193 = sphi 0, %s192
      %s207 = sphi 0, %s193
      %s211 = sphi 0, %s211
      %s213 = sphi 0, %s211
      %s214 = sphi 0, %s213
      %s228 = sphi 0, %s214
      %s232 = sphi 0, %s232
      %s234 = sphi 0, %s232
      %s235 = sphi 0, %s234
      %s249 = sphi 0, %s235
      %s255 = sphi 0, %s257
      %s258 = sphi 0, %s255
      %s259 = sphi 0, %s258
      %s275 = sphi 0, %s259
    $region4: #{tpu_custom_call.1} parent=1 // loop_header_branch
      %23 = sbr.rel (%p21) target = $region8
    $region5: #{tpu_custom_call.1} parent=1 // loop_body
      %s25 = ssub.s32 %s20, 1
      %s26 = ssub.s32 %s20, 2
      %s27 = sadd.s32 %s20, 1
      %s28 = ssub.s32 %s20, %s27
      %p29 = scmp.eq.s32.totalorder %s28, 0
      %s31 = sadd.s32 %s30, 1
      %s32 = scalar_select %p29, %s30, %s31
      %p35 = pneg %p29
      %p36 = scmp.eq.s32.totalorder %s20, 1
      %p37 = por %p35, %p36
      %p38 = scmp.ne.s32.totalorder %s30, %s33
      %p39 = scmp.eq.s32.totalorder %s20, 0
      %p40 = por %p38, %p39
      %p41 = scmp.ne.s32.totalorder %s30, %s33
      %p42 = scmp.eq.s32.totalorder %s25, 1
      %p43 = por %p41, %p42
      %p44 = scmp.ne.s32.totalorder %s33, %s34
      %p45 = scmp.eq.s32.totalorder %s25, 0
      %p46 = por %p44, %p45
      %p47 = scmp.ne.s32.totalorder %s33, %s34
      %p48 = scmp.eq.s32.totalorder %s26, 1
      %p49 = por %p47, %p48
      %p51 = scmp.ne.s32.totalorder %s34, %s50
      %p52 = scmp.eq.s32.totalorder %s26, 0
      %p53 = por %p51, %p52
      %s54 = ssub.s32 %s20, %s27
      %p55 = scmp.eq.s32.totalorder %s54, 0
      %s57 = sadd.s32 %s56, 1
      %s58 = scalar_select %p55, %s56, %s57
      %p61 = pneg %p55
      %p62 = scmp.eq.s32.totalorder %s20, 1
      %p63 = por %p61, %p62
      %p64 = scmp.ne.s32.totalorder %s56, %s59
      %p65 = scmp.eq.s32.totalorder %s20, 0
      %p66 = por %p64, %p65
      %p67 = scmp.ne.s32.totalorder %s56, %s59
      %p68 = scmp.eq.s32.totalorder %s25, 1
      %p69 = por %p67, %p68
      %p70 = scmp.ne.s32.totalorder %s59, %s60
      %p71 = scmp.eq.s32.totalorder %s25, 0
      %p72 = por %p70, %p71
      %p73 = scmp.ne.s32.totalorder %s59, %s60
      %p74 = scmp.eq.s32.totalorder %s26, 1
      %p75 = por %p73, %p74
      %p77 = scmp.ne.s32.totalorder %s60, %s76
      %p78 = scmp.eq.s32.totalorder %s26, 0
      %p79 = por %p77, %p78
      %s80 = ssub.s32 %s20, %s27
      %p81 = scmp.eq.s32.totalorder %s80, 0
      %s83 = sadd.s32 %s82, 1
      %s84 = scalar_select %p81, %s82, %s83
      %p87 = pneg %p81
      %p88 = scmp.eq.s32.totalorder %s20, 1
      %p89 = por %p87, %p88
      %p90 = scmp.ne.s32.totalorder %s82, %s85
      %p91 = scmp.eq.s32.totalorder %s20, 0
      %p92 = por %p90, %p91
      %p93 = scmp.ne.s32.totalorder %s82, %s85
      %p94 = scmp.eq.s32.totalorder %s25, 1
      %p95 = por %p93, %p94
      %p96 = scmp.ne.s32.totalorder %s85, %s86
      %p97 = scmp.eq.s32.totalorder %s25, 0
      %p98 = por %p96, %p97
      %p99 = scmp.ne.s32.totalorder %s85, %s86
      %p100 = scmp.eq.s32.totalorder %s26, 1
      %p101 = por %p99, %p100
      %p103 = scmp.ne.s32.totalorder %s86, %s102
      %p104 = scmp.eq.s32.totalorder %s26, 0
      %p105 = por %p103, %p104
      %s107 = sadd.s32 %s106, 1
      %p110 = scmp.eq.s32.totalorder %s20, 1
      %p111 = scmp.ne.s32.totalorder %s106, %s108
      %p112 = scmp.eq.s32.totalorder %s20, 0
      %p113 = por %p111, %p112
      %p114 = scmp.ne.s32.totalorder %s106, %s108
      %p115 = scmp.eq.s32.totalorder %s25, 1
      %p116 = por %p114, %p115
      %p117 = scmp.ne.s32.totalorder %s108, %s109
      %p118 = scmp.eq.s32.totalorder %s25, 0
      %p119 = por %p117, %p118
      %p120 = scmp.ne.s32.totalorder %s108, %s109
      %p121 = scmp.eq.s32.totalorder %s26, 1
      %p122 = por %p120, %p121
      %p124 = scmp.ne.s32.totalorder %s109, %s123
      %p125 = scmp.eq.s32.totalorder %s26, 0
      %p126 = por %p124, %p125
      %s128 = sadd.s32 %s127, 1
      %p131 = scmp.eq.s32.totalorder %s20, 1
      %p132 = scmp.ne.s32.totalorder %s127, %s129
      %p133 = scmp.eq.s32.totalorder %s20, 0
      %p134 = por %p132, %p133
      %p135 = scmp.ne.s32.totalorder %s127, %s129
      %p136 = scmp.eq.s32.totalorder %s25, 1
      %p137 = por %p135, %p136
      %p138 = scmp.ne.s32.totalorder %s129, %s130
      %p139 = scmp.eq.s32.totalorder %s25, 0
      %p140 = por %p138, %p139
      %p141 = scmp.ne.s32.totalorder %s129, %s130
      %p142 = scmp.eq.s32.totalorder %s26, 1
      %p143 = por %p141, %p142
      %p145 = scmp.ne.s32.totalorder %s130, %s144
      %p146 = scmp.eq.s32.totalorder %s26, 0
      %p147 = por %p145, %p146
      %s149 = sadd.s32 %s148, 1
      %p152 = scmp.eq.s32.totalorder %s20, 1
      %p153 = scmp.ne.s32.totalorder %s148, %s150
      %p154 = scmp.eq.s32.totalorder %s20, 0
      %p155 = por %p153, %p154
      %p156 = scmp.ne.s32.totalorder %s148, %s150
      %p157 = scmp.eq.s32.totalorder %s25, 1
      %p158 = por %p156, %p157
      %p159 = scmp.ne.s32.totalorder %s150, %s151
      %p160 = scmp.eq.s32.totalorder %s25, 0
      %p161 = por %p159, %p160
      %p162 = scmp.ne.s32.totalorder %s150, %s151
      %p163 = scmp.eq.s32.totalorder %s26, 1
      %p164 = por %p162, %p163
      %p166 = scmp.ne.s32.totalorder %s151, %s165
      %p167 = scmp.eq.s32.totalorder %s26, 0
      %p168 = por %p166, %p167
      %s170 = sadd.s32 %s169, 1
      %p173 = scmp.eq.s32.totalorder %s20, 1
      %p174 = scmp.ne.s32.totalorder %s169, %s171
      %p175 = scmp.eq.s32.totalorder %s20, 0
      %p176 = por %p174, %p175
      %p177 = scmp.ne.s32.totalorder %s169, %s171
      %p178 = scmp.eq.s32.totalorder %s25, 1
      %p179 = por %p177, %p178
      %p180 = scmp.ne.s32.totalorder %s171, %s172
      %p181 = scmp.eq.s32.totalorder %s25, 0
      %p182 = por %p180, %p181
      %p183 = scmp.ne.s32.totalorder %s171, %s172
      %p184 = scmp.eq.s32.totalorder %s26, 1
      %p185 = por %p183, %p184
      %p187 = scmp.ne.s32.totalorder %s172, %s186
      %p188 = scmp.eq.s32.totalorder %s26, 0
      %p189 = por %p187, %p188
      %s191 = sadd.s32 %s190, 1
      %p194 = scmp.eq.s32.totalorder %s20, 1
      %p195 = scmp.ne.s32.totalorder %s190, %s192
      %p196 = scmp.eq.s32.totalorder %s20, 0
      %p197 = por %p195, %p196
      %p198 = scmp.ne.s32.totalorder %s190, %s192
      %p199 = scmp.eq.s32.totalorder %s25, 1
      %p200 = por %p198, %p199
      %p201 = scmp.ne.s32.totalorder %s192, %s193
      %p202 = scmp.eq.s32.totalorder %s25, 0
      %p203 = por %p201, %p202
      %p204 = scmp.ne.s32.totalorder %s192, %s193
      %p205 = scmp.eq.s32.totalorder %s26, 1
      %p206 = por %p204, %p205
      %p208 = scmp.ne.s32.totalorder %s193, %s207
      %p209 = scmp.eq.s32.totalorder %s26, 0
      %p210 = por %p208, %p209
      %s212 = sadd.s32 %s211, 1
      %p215 = scmp.eq.s32.totalorder %s20, 1
      %p216 = scmp.ne.s32.totalorder %s211, %s213
      %p217 = scmp.eq.s32.totalorder %s20, 0
      %p218 = por %p216, %p217
      %p219 = scmp.ne.s32.totalorder %s211, %s213
      %p220 = scmp.eq.s32.totalorder %s25, 1
      %p221 = por %p219, %p220
      %p222 = scmp.ne.s32.totalorder %s213, %s214
      %p223 = scmp.eq.s32.totalorder %s25, 0
      %p224 = por %p222, %p223
      %p225 = scmp.ne.s32.totalorder %s213, %s214
      %p226 = scmp.eq.s32.totalorder %s26, 1
      %p227 = por %p225, %p226
      %p229 = scmp.ne.s32.totalorder %s214, %s228
      %p230 = scmp.eq.s32.totalorder %s26, 0
      %p231 = por %p229, %p230
      %s233 = sadd.s32 %s232, 1
      %p236 = scmp.eq.s32.totalorder %s20, 1
      %p237 = scmp.ne.s32.totalorder %s232, %s234
      %p238 = scmp.eq.s32.totalorder %s20, 0
      %p239 = por %p237, %p238
      %p240 = scmp.ne.s32.totalorder %s232, %s234
      %p241 = scmp.eq.s32.totalorder %s25, 1
      %p242 = por %p240, %p241
      %p243 = scmp.ne.s32.totalorder %s234, %s235
      %p244 = scmp.eq.s32.totalorder %s25, 0
      %p245 = por %p243, %p244
      %p246 = scmp.ne.s32.totalorder %s234, %s235
      %p247 = scmp.eq.s32.totalorder %s26, 1
      %p248 = por %p246, %p247
      %p250 = scmp.ne.s32.totalorder %s235, %s249
      %p251 = scmp.eq.s32.totalorder %s26, 0
      %p252 = por %p250, %p251
      %s253 = ssub.s32 %s20, %s27
      %p254 = scmp.eq.s32.totalorder %s253, 0
      %s256 = sadd.s32 %s255, 1
      %s257 = scalar_select %p254, %s255, %s256
      %p260 = pneg %p254
      %p261 = scmp.eq.s32.totalorder %s20, 1
      %p262 = por %p260, %p261
      %p263 = scmp.ne.s32.totalorder %s255, %s258
      %p264 = scmp.eq.s32.totalorder %s20, 0
      %p265 = por %p263, %p264
      %p266 = scmp.ne.s32.totalorder %s255, %s258
      %p267 = scmp.eq.s32.totalorder %s25, 1
      %p268 = por %p266, %p267
      %p269 = scmp.ne.s32.totalorder %s258, %s259
      %p270 = scmp.eq.s32.totalorder %s25, 0
      %p271 = por %p269, %p270
      %p272 = scmp.ne.s32.totalorder %s258, %s259
      %p273 = scmp.eq.s32.totalorder %s26, 1
      %p274 = por %p272, %p273
      %p276 = scmp.ne.s32.totalorder %s259, %s275
      %p277 = scmp.eq.s32.totalorder %s26, 0
      %p278 = por %p276, %p277
      %p279 = scmp.le.s32.totalorder 1, %s20
      %p280 = scmp.lt.s32.totalorder %s20, 3
      %p281 = pnand %p279, %p280
      %p282 = pneg %p281
      // Predicated region
      $region9: #{tpu_custom_call.1} parent=5 // pred_check
        _
      $region10: #{tpu_custom_call.1} parent=5 // pred_check_branch
        %284 = sbr.rel (%p281) target = $region12
      $region11: #{tpu_custom_call.1} parent=5 // pred_region
        %s285 = ssub.s32 %s20, 1
        // Predicated region
        $region13: #{tpu_custom_call.1} parent=11 // pred_check
          %p286 = pneg %p119
        $region14: #{tpu_custom_call.1} parent=11 // pred_check_branch
          %288 = sbr.rel (%p286) target = $region16
        $region15: #{tpu_custom_call.1} parent=11 // pred_region
          _
        $region16: #{tpu_custom_call.1} parent=11 // pred_fallthru
          _
        // Predicated region
        $region17: #{tpu_custom_call.1} parent=11 // pred_check
          %p289 = pneg %p140
        $region18: #{tpu_custom_call.1} parent=11 // pred_check_branch
          %291 = sbr.rel (%p289) target = $region20
        $region19: #{tpu_custom_call.1} parent=11 // pred_region
          _
        $region20: #{tpu_custom_call.1} parent=11 // pred_fallthru
          _
        // Predicated region
        $region21: #{tpu_custom_call.1} parent=11 // pred_check
          %p292 = pneg %p161
        $region22: #{tpu_custom_call.1} parent=11 // pred_check_branch
          %294 = sbr.rel (%p292) target = $region24
        $region23: #{tpu_custom_call.1} parent=11 // pred_region
          _
        $region24: #{tpu_custom_call.1} parent=11 // pred_fallthru
          _
        // Predicated region
        $region25: #{tpu_custom_call.1} parent=11 // pred_check
          %p295 = pneg %p182
        $region26: #{tpu_custom_call.1} parent=11 // pred_check_branch
          %297 = sbr.rel (%p295) target = $region28
        $region27: #{tpu_custom_call.1} parent=11 // pred_region
          _
        $region28: #{tpu_custom_call.1} parent=11 // pred_fallthru
          _
        // Predicated region
        $region29: #{tpu_custom_call.1} parent=11 // pred_check
          %p298 = pneg %p203
        $region30: #{tpu_custom_call.1} parent=11 // pred_check_branch
          %300 = sbr.rel (%p298) target = $region32
        $region31: #{tpu_custom_call.1} parent=11 // pred_region
          _
        $region32: #{tpu_custom_call.1} parent=11 // pred_fallthru
          _
        // Predicated region
        $region33: #{tpu_custom_call.1} parent=11 // pred_check
          %p301 = pneg %p224
        $region34: #{tpu_custom_call.1} parent=11 // pred_check_branch
          %303 = sbr.rel (%p301) target = $region36
        $region35: #{tpu_custom_call.1} parent=11 // pred_region
          _
        $region36: #{tpu_custom_call.1} parent=11 // pred_fallthru
          _
        // Predicated region
        $region37: #{tpu_custom_call.1} parent=11 // pred_check
          %p304 = pneg %p245
        $region38: #{tpu_custom_call.1} parent=11 // pred_check_branch
          %306 = sbr.rel (%p304) target = $region40
        $region39: #{tpu_custom_call.1} parent=11 // pred_region
          _
        $region40: #{tpu_custom_call.1} parent=11 // pred_fallthru
          _
      $region12: #{tpu_custom_call.1} parent=5 // pred_fallthru
        _
      %p307 = scmp.lt.s32.totalorder %s20, 2
      // Predicated region
      $region41: #{tpu_custom_call.1} parent=5 // pred_check
        %p308 = pneg %p307
      $region42: #{tpu_custom_call.1} parent=5 // pred_check_branch
        %310 = sbr.rel (%p308) target = $region44
      $region43: #{tpu_custom_call.1} parent=5 // pred_region
        // Predicated region
        $region45: #{tpu_custom_call.1} parent=43 // pred_check
          %p311 = pneg %p40
        $region46: #{tpu_custom_call.1} parent=43 // pred_check_branch
          %313 = sbr.rel (%p311) target = $region48
        $region47: #{tpu_custom_call.1} parent=43 // pred_region
          %p314 = scmp.lt.s32.totalorder %s20, 1
          %s315 = scalar_select %p314, %s20, 1
          %s316 = smul.addr %s315, 8
          %s317 = scalar_lea.vmem %s0, %s316
        $region48: #{tpu_custom_call.1} parent=43 // pred_fallthru
          _
        // Predicated region
        $region49: #{tpu_custom_call.1} parent=43 // pred_check
          %p318 = pneg %p66
        $region50: #{tpu_custom_call.1} parent=43 // pred_check_branch
          %320 = sbr.rel (%p318) target = $region52
        $region51: #{tpu_custom_call.1} parent=43 // pred_region
          %p321 = scmp.lt.s32.totalorder %s20, 1
          %s322 = scalar_select %p321, %s20, 1
          %s323 = smul.addr %s322, 8
          %s324 = scalar_lea.vmem %s1, %s323
        $region52: #{tpu_custom_call.1} parent=43 // pred_fallthru
          _
        // Predicated region
        $region53: #{tpu_custom_call.1} parent=43 // pred_check
          %p325 = pneg %p92
        $region54: #{tpu_custom_call.1} parent=43 // pred_check_branch
          %327 = sbr.rel (%p325) target = $region56
        $region55: #{tpu_custom_call.1} parent=43 // pred_region
          %p328 = scmp.lt.s32.totalorder %s20, 1
          %s329 = scalar_select %p328, %s20, 1
          %s330 = scalar_lea.vmem %s2, %s329
        $region56: #{tpu_custom_call.1} parent=43 // pred_fallthru
          _
      $region44: #{tpu_custom_call.1} parent=5 // pred_fallthru
        _
      %p331 = scmp.le.s32.totalorder 1, %s20
      %p332 = scmp.lt.s32.totalorder %s20, 3
      %p333 = pnand %p331, %p332
      %p334 = pneg %p333
      // Predicated region
      $region57: #{tpu_custom_call.1} parent=5 // pred_check
        _
      $region58: #{tpu_custom_call.1} parent=5 // pred_check_branch
        %336 = sbr.rel (%p333) target = $region60
      $region59: #{tpu_custom_call.1} parent=5 // pred_region
        %s337 = ssub.s32 %s20, 1
        %p338 = scmp.lt.s32.totalorder %s25, 1
        %s339 = scalar_select %p338, %s25, 1
        %s340 = smul.addr %s339, 8
        %s341 = scalar_lea.vmem %s0, %s340
        %p342 = pneg %p46
        %p343 = pneg %p43
        %p344 = scmp.lt.s32.totalorder %s25, 1
        %s345 = scalar_select %p344, %s25, 1
        %s346 = smul.addr %s345, 8
        %s347 = scalar_lea.vmem %s1, %s346
        %p348 = pneg %p72
        %p349 = pneg %p69
        %p350 = scmp.lt.s32.totalorder %s25, 1
        %s351 = scalar_select %p350, %s25, 1
        %s352 = scalar_lea.vmem %s2, %s351
        %p353 = pneg %p98
        %p354 = pneg %p95
        %p355 = pneg %p119
        %p356 = pneg %p116
        %p357 = pneg %p140
        %p358 = pneg %p137
        %p359 = pneg %p161
        %p360 = pneg %p158
        %p361 = pneg %p182
        %p362 = pneg %p179
        %p363 = pneg %p203
        %p364 = pneg %p200
        %p365 = pneg %p224
        %p366 = pneg %p221
        %p367 = pneg %p245
        %p368 = pneg %p242
        %p369 = pneg %p271
        %p370 = pneg %p268
        %s371 = sand.u32 %s258, 1
        %s372 = scalar_lea.sflag [#allocation4], %s371
        %s373 = sand.u32 %s258, 1
        %s374 = scalar_lea.vmem [#allocation3], %s373
        %p375 = scmp.lt.s32.totalorder %s25, 1
        %s376 = scalar_select %p375, %s25, 1
        %s377 = smul.addr %s376, 8
        %s378 = scalar_lea.vmem %s0, %s377
        %p379 = scmp.lt.s32.totalorder %s25, 1
        %s380 = scalar_select %p379, %s25, 1
        %s381 = smul.addr %s380, 8
        %s382 = scalar_lea.vmem %s1, %s381
        %p383 = scmp.lt.s32.totalorder %s25, 1
        %s384 = scalar_select %p383, %s25, 1
        %s385 = scalar_lea.vmem %s2, %s384
        %v387 = vld [vmem:[%s378] sm:$0xff]
        %v388 = vld [vmem:[%s382] sm:$0xff]
        %vm389 = vcmask 64512
        %v390 = vsel %vm389, %v388, 0.0
        %391 = vadd.xlane.f32.xlu0 %v390
        %v392 = vpop.xlane.xlu0 %391
        %v393 = vmax.f32 %v392, 1.0
        %v394 = vrcp.pop %v393
        %v395 = vmul.f32 1.0, %v394
        %v396 = vmul.f32 %v388, %v395
        %v397 = vlaneseq
        %v398 = vand.u32 %v397, 127
        %399 = vset.pattern.permute.xlu0 0
        %400 = vperm.xlu0 %399, %v387
        %v401 = vpop.permute.xlu0 %400
        %vm402 = vcmp.eq.s32.totalorder %v401, %v398
        %404 = vset.pattern.permute.xlu0 0
        %405 = vperm.xlu0 %404, %v396
        %v406 = vpop.permute.xlu0 %405
        %v408 = vsel %vm402, %v406, 0.0
        %v409 = vadd.f32 %v408, 0.0
        %410 = vset.pattern.permute.xlu0 1
        %411 = vperm.xlu0 %410, %v387
        %v412 = vpop.permute.xlu0 %411
        %vm413 = vcmp.eq.s32.totalorder %v412, %v398
        %414 = vset.pattern.permute.xlu0 1
        %415 = vperm.xlu0 %414, %v396
        %v416 = vpop.permute.xlu0 %415
        %v418 = vsel %vm413, %v416, 0.0
        %v419 = vadd.f32 %v409, %v418
        %420 = vset.pattern.permute.xlu0 2
        %421 = vperm.xlu0 %420, %v387
        %v422 = vpop.permute.xlu0 %421
        %vm423 = vcmp.eq.s32.totalorder %v422, %v398
        %424 = vset.pattern.permute.xlu0 2
        %425 = vperm.xlu0 %424, %v396
        %v426 = vpop.permute.xlu0 %425
        %v428 = vsel %vm423, %v426, 0.0
        %v429 = vadd.f32 %v419, %v428
        %430 = vset.pattern.permute.xlu0 3
        %431 = vperm.xlu0 %430, %v387
        %v432 = vpop.permute.xlu0 %431
        %vm433 = vcmp.eq.s32.totalorder %v432, %v398
        %434 = vset.pattern.permute.xlu0 3
        %435 = vperm.xlu0 %434, %v396
        %v436 = vpop.permute.xlu0 %435
        %v438 = vsel %vm433, %v436, 0.0
        %v439 = vadd.f32 %v429, %v438
        %440 = vset.pattern.permute.xlu0 4
        %441 = vperm.xlu0 %440, %v387
        %v442 = vpop.permute.xlu0 %441
        %vm443 = vcmp.eq.s32.totalorder %v442, %v398
        %444 = vset.pattern.permute.xlu0 4
        %445 = vperm.xlu0 %444, %v396
        %v446 = vpop.permute.xlu0 %445
        %v448 = vsel %vm443, %v446, 0.0
        %v449 = vadd.f32 %v439, %v448
        %450 = vset.pattern.permute.xlu0 5
        %451 = vperm.xlu0 %450, %v387
        %v452 = vpop.permute.xlu0 %451
        %vm453 = vcmp.eq.s32.totalorder %v452, %v398
        %454 = vset.pattern.permute.xlu0 5
        %455 = vperm.xlu0 %454, %v396
        %v456 = vpop.permute.xlu0 %455
        %v458 = vsel %vm453, %v456, 0.0
        %v459 = vadd.f32 %v449, %v458
        %460 = vset.pattern.permute.xlu0 6
        %461 = vperm.xlu0 %460, %v387
        %v462 = vpop.permute.xlu0 %461
        %vm463 = vcmp.eq.s32.totalorder %v462, %v398
        %464 = vset.pattern.permute.xlu0 6
        %465 = vperm.xlu0 %464, %v396
        %v466 = vpop.permute.xlu0 %465
        %v468 = vsel %vm463, %v466, 0.0
        %v469 = vadd.f32 %v459, %v468
        %470 = vset.pattern.permute.xlu0 7
        %471 = vperm.xlu0 %470, %v387
        %v472 = vpop.permute.xlu0 %471
        %vm473 = vcmp.eq.s32.totalorder %v472, %v398
        %474 = vset.pattern.permute.xlu0 7
        %475 = vperm.xlu0 %474, %v396
        %v476 = vpop.permute.xlu0 %475
        %v478 = vsel %vm473, %v476, 0.0
        %v479 = vadd.f32 %v469, %v478
        %v480 = vpack.c.bf16 %v479, %v479
        %v481 = vld [vmem:[%s3] sm:$0xf]
        %v482 = vld [vmem:[%s3 + $0x4] sm:$0xf]
        %v483 = vld [vmem:[%s3 + $0x8] sm:$0xf]
        %v484 = vld [vmem:[%s3 + $0xc] sm:$0xf]
        %v485 = vld [vmem:[%s3 + $0x10] sm:$0xf]
        %v486 = vld [vmem:[%s3 + $0x14] sm:$0xf]
        %v487 = vld [vmem:[%s3 + $0x18] sm:$0xf]
        %v488 = vld [vmem:[%s3 + $0x1c] sm:$0xf]
        %v489 = vld [vmem:[%s3 + $0x20] sm:$0xf]
        %v490 = vld [vmem:[%s3 + $0x24] sm:$0xf]
        %v491 = vld [vmem:[%s3 + $0x28] sm:$0xf]
        %v492 = vld [vmem:[%s3 + $0x2c] sm:$0xf]
        %v493 = vld [vmem:[%s3 + $0x30] sm:$0x3]
        %v507 = vunpack.c.l.b16 %v481
        %v508 = vunpack.c.l.b16 %v482
        %v509 = vunpack.c.l.b16 %v483
        %v510 = vunpack.c.l.b16 %v484
        %v511 = vunpack.c.l.b16 %v485
        %v512 = vunpack.c.l.b16 %v486
        %v513 = vunpack.c.l.b16 %v487
        %v514 = vunpack.c.l.b16 %v488
        %v515 = vunpack.c.l.b16 %v489
        %v516 = vunpack.c.l.b16 %v490
        %v517 = vunpack.c.l.b16 %v491
        %v518 = vunpack.c.l.b16 %v492
        %v519 = vunpack.c.l.b16 %v493
        %v520 = vpack.c.b16 %v508, %v507
        %v521 = vpack.c.b16 %v510, %v509
        %v522 = vpack.c.b16 %v512, %v511
        %v523 = vpack.c.b16 %v514, %v513
        %v524 = vpack.c.b16 %v516, %v515
        %v525 = vpack.c.b16 %v518, %v517
        %v526 = vpack.c.b16 %v519, %v519
        %vm533 = vcmask 818176
        %v535 = vsel %vm533, %v480, 0
        %vm537 = vcmask 1041408
        %v539 = vsel %vm537, %v526, 0
        %541 = vmatprep.subr.bf16.mxu0 0
        %542 = vmatpush1.bf16.msra.mxu0 %v520
        %543 = vmatprep.subr.bf16.mxu0 0
        %544 = vmatpush1.bf16.msra.mxu0 %v521
        %545 = vmatprep.subr.bf16.mxu0 0
        %546 = vmatpush1.bf16.msra.mxu0 %v522
        %547 = vmatprep.subr.bf16.mxu0 0
        %548 = vmatpush1.bf16.msra.mxu0 %v523
        %549 = vmatprep.subr.bf16.mxu0 0
        %550 = vmatpush1.bf16.msra.mxu0 %v524
        %551 = vmatprep.subr.bf16.mxu0 0
        %552 = vmatpush1.bf16.msra.mxu0 %v525
        %553 = vmatprep.subr.bf16.mxu0 0
        %554 = vmatpush1.bf16.msra.mxu0 %v539
        %555 = vmatprep.subr.bf16.mxu0 0
        %556 = vmatpush1.bf16.msra.mxu0 0
        %557 = vmatprep.subr.bf16.mxu0 0
        %558 = vmatpush1.bf16.msra.mxu0 0
        %559 = vmatprep.subr.bf16.mxu0 0
        %560 = vmatpush1.bf16.msra.mxu0 0
        %561 = vmatprep.subr.bf16.mxu0 0
        %562 = vmatpush1.bf16.msra.mxu0 0
        %563 = vmatprep.subr.bf16.mxu0 0
        %564 = vmatpush1.bf16.msra.mxu0 0
        %565 = vmatprep.subr.bf16.mxu0 0
        %566 = vmatpush1.bf16.msra.mxu0 0
        %567 = vmatprep.subr.bf16.mxu0 0
        %568 = vmatpush1.bf16.msra.mxu0 0
        %569 = vmatprep.subr.bf16.mxu0 0
        %570 = vmatpush1.bf16.msra.mxu0 0
        %571 = vmatprep.subr.bf16.mxu0 0
        %572 = vmatpush1.bf16.msra.mxu0 0
        %573 = vmatprep.mubr.bf16.mxu0 0
        %574 = vmatmul.mubr.bf16.gmra.mrb[0].mxu0 %v535
        %v575 = vpop.f32.mrb[0].mxu0
        %v576 = vadd.f32 0.0, %v575
        %v577 = vpop.f32.mrb[0].mxu0
        %v578 = vpop.f32.mrb[0].mxu0
        %v579 = vpop.f32.mrb[0].mxu0
        %580 = vdwg.mxu0
        %v581 = vpack.c.bf16 %v576, %v576
        %v582 = vld [vmem:[%s4] sm:$0xf]
        %v583 = vld [vmem:[%s4 + $0x4] sm:$0xf]
        %v584 = vld [vmem:[%s4 + $0x8] sm:$0xf]
        %v585 = vld [vmem:[%s4 + $0xc] sm:$0xf]
        %v586 = vld [vmem:[%s5] sm:$0x1]
        %v588 = vlaneseq
        %v589 = vshrl.u32 %v588, 7
        %v590 = vsub.s32 0, %v589
        %v591 = vrot.slane %v586, %v590
        %v597 = vunpack.c.l.b16 %v582
        %v598 = vunpack.c.l.b16 %v583
        %v599 = vunpack.c.l.b16 %v584
        %v600 = vunpack.c.l.b16 %v585
        %v601 = vpack.c.b16 %v598, %v597
        %v602 = vpack.c.b16 %v600, %v599
        %vm605 = vcmask 261120
        %v607 = vsel %vm605, %v581, 0
        %609 = vmatprep.subr.bf16.mxu0 0
        %610 = vmatpush1.bf16.msra.mxu0 %v601
        %611 = vmatprep.subr.bf16.mxu0 0
        %612 = vmatpush1.bf16.msra.mxu0 %v602
        %613 = vmatprep.subr.bf16.mxu0 0
        %614 = vmatpush1.bf16.msra.mxu0 0
        %615 = vmatprep.subr.bf16.mxu0 0
        %616 = vmatpush1.bf16.msra.mxu0 0
        %617 = vmatprep.subr.bf16.mxu0 0
        %618 = vmatpush1.bf16.msra.mxu0 0
        %619 = vmatprep.subr.bf16.mxu0 0
        %620 = vmatpush1.bf16.msra.mxu0 0
        %621 = vmatprep.subr.bf16.mxu0 0
        %622 = vmatpush1.bf16.msra.mxu0 0
        %623 = vmatprep.subr.bf16.mxu0 0
        %624 = vmatpush1.bf16.msra.mxu0 0
        %625 = vmatprep.subr.bf16.mxu0 0
        %626 = vmatpush1.bf16.msra.mxu0 0
        %627 = vmatprep.subr.bf16.mxu0 0
        %628 = vmatpush1.bf16.msra.mxu0 0
        %629 = vmatprep.subr.bf16.mxu0 0
        %630 = vmatpush1.bf16.msra.mxu0 0
        %631 = vmatprep.subr.bf16.mxu0 0
        %632 = vmatpush1.bf16.msra.mxu0 0
        %633 = vmatprep.subr.bf16.mxu0 0
        %634 = vmatpush1.bf16.msra.mxu0 0
        %635 = vmatprep.subr.bf16.mxu0 0
        %636 = vmatpush1.bf16.msra.mxu0 0
        %637 = vmatprep.subr.bf16.mxu0 0
        %638 = vmatpush1.bf16.msra.mxu0 0
        %639 = vmatprep.subr.bf16.mxu0 0
        %640 = vmatpush1.bf16.msra.mxu0 0
        %641 = vmatprep.mubr.bf16.mxu0 0
        %642 = vmatmul.mubr.bf16.gmra.mrb[0].mxu0 %v607
        %v643 = vpop.f32.mrb[0].mxu0
        %v644 = vadd.f32 %v591, %v643
        %v645 = vpop.f32.mrb[0].mxu0
        %v646 = vpop.f32.mrb[0].mxu0
        %v647 = vpop.f32.mrb[0].mxu0
        %648 = vdwg.mxu0
        %v649 = vtanh.pop %v644
        %v650 = vpack.c.bf16 %v649, %v649
        %v651 = vld [vmem:[%s6] sm:$0xf]
        %v652 = vld [vmem:[%s6 + $0x4] sm:$0xf]
        %v653 = vld [vmem:[%s6 + $0x8] sm:$0xf]
        %v654 = vld [vmem:[%s6 + $0xc] sm:$0xf]
        %v655 = vld [vmem:[%s7] sm:$0x1]
        %v657 = vlaneseq
        %v658 = vshrl.u32 %v657, 7
        %v659 = vsub.s32 0, %v658
        %v660 = vrot.slane %v655, %v659
        %v666 = vunpack.c.l.b16 %v651
        %v667 = vunpack.c.l.b16 %v652
        %v668 = vunpack.c.l.b16 %v653
        %v669 = vunpack.c.l.b16 %v654
        %v670 = vpack.c.b16 %v667, %v666
        %v671 = vpack.c.b16 %v669, %v668
        %v675 = vsel %vm605, %v650, 0
        %677 = vmatprep.subr.bf16.mxu0 0
        %678 = vmatpush1.bf16.msra.mxu0 %v670
        %679 = vmatprep.subr.bf16.mxu0 0
        %680 = vmatpush1.bf16.msra.mxu0 %v671
        %681 = vmatprep.subr.bf16.mxu0 0
        %682 = vmatpush1.bf16.msra.mxu0 0
        %683 = vmatprep.subr.bf16.mxu0 0
        %684 = vmatpush1.bf16.msra.mxu0 0
        %685 = vmatprep.subr.bf16.mxu0 0
        %686 = vmatpush1.bf16.msra.mxu0 0
        %687 = vmatprep.subr.bf16.mxu0 0
        %688 = vmatpush1.bf16.msra.mxu0 0
        %689 = vmatprep.subr.bf16.mxu0 0
        %690 = vmatpush1.bf16.msra.mxu0 0
        %691 = vmatprep.subr.bf16.mxu0 0
        %692 = vmatpush1.bf16.msra.mxu0 0
        %693 = vmatprep.subr.bf16.mxu0 0
        %694 = vmatpush1.bf16.msra.mxu0 0
        %695 = vmatprep.subr.bf16.mxu0 0
        %696 = vmatpush1.bf16.msra.mxu0 0
        %697 = vmatprep.subr.bf16.mxu0 0
        %698 = vmatpush1.bf16.msra.mxu0 0
        %699 = vmatprep.subr.bf16.mxu0 0
        %700 = vmatpush1.bf16.msra.mxu0 0
        %701 = vmatprep.subr.bf16.mxu0 0
        %702 = vmatpush1.bf16.msra.mxu0 0
        %703 = vmatprep.subr.bf16.mxu0 0
        %704 = vmatpush1.bf16.msra.mxu0 0
        %705 = vmatprep.subr.bf16.mxu0 0
        %706 = vmatpush1.bf16.msra.mxu0 0
        %707 = vmatprep.subr.bf16.mxu0 0
        %708 = vmatpush1.bf16.msra.mxu0 0
        %709 = vmatprep.mubr.bf16.mxu0 0
        %710 = vmatmul.mubr.bf16.gmra.mrb[0].mxu0 %v675
        %v711 = vpop.f32.mrb[0].mxu0
        %v712 = vadd.f32 %v660, %v711
        %v713 = vpop.f32.mrb[0].mxu0
        %v714 = vpop.f32.mrb[0].mxu0
        %v715 = vpop.f32.mrb[0].mxu0
        %716 = vdwg.mxu0
        %v717 = vtanh.pop %v712
        %v718 = vld [vmem:[%s8] sm:$0x1]
        %v719 = vpack.c.bf16 %v717, %v717
        %s720 = sld [smem:[#allocation2]]
        %v721 = vstv %s720
        %v723 = vsel %vm605, %v718, 0
        %v726 = vsel %vm605, %v719, 0
        %728 = vmatprep.subr.bf16.mxu0 0
        %729 = vmatpush1.bf16.xpose.msra.mxu0 %v726
        %730 = vmatprep.subr.bf16.mxu0 0
        %731 = vmatpush1.bf16.xpose.msra.mxu0 0
        %732 = vmatprep.subr.bf16.mxu0 0
        %733 = vmatpush1.bf16.xpose.msra.mxu0 0
        %734 = vmatprep.subr.bf16.mxu0 0
        %735 = vmatpush1.bf16.xpose.msra.mxu0 0
        %736 = vmatprep.subr.bf16.mxu0 0
        %737 = vmatpush1.bf16.xpose.msra.mxu0 0
        %738 = vmatprep.subr.bf16.mxu0 0
        %739 = vmatpush1.bf16.xpose.msra.mxu0 0
        %740 = vmatprep.subr.bf16.mxu0 0
        %741 = vmatpush1.bf16.xpose.msra.mxu0 0
        %742 = vmatprep.subr.bf16.mxu0 0
        %743 = vmatpush1.bf16.xpose.msra.mxu0 0
        %744 = vmatprep.subr.bf16.mxu0 0
        %745 = vmatpush1.bf16.xpose.msra.mxu0 0
        %746 = vmatprep.subr.bf16.mxu0 0
        %747 = vmatpush1.bf16.xpose.msra.mxu0 0
        %748 = vmatprep.subr.bf16.mxu0 0
        %749 = vmatpush1.bf16.xpose.msra.mxu0 0
        %750 = vmatprep.subr.bf16.mxu0 0
        %751 = vmatpush1.bf16.xpose.msra.mxu0 0
        %752 = vmatprep.subr.bf16.mxu0 0
        %753 = vmatpush1.bf16.xpose.msra.mxu0 0
        %754 = vmatprep.subr.bf16.mxu0 0
        %755 = vmatpush1.bf16.xpose.msra.mxu0 0
        %756 = vmatprep.subr.bf16.mxu0 0
        %757 = vmatpush1.bf16.xpose.msra.mxu0 0
        %758 = vmatprep.subr.bf16.mxu0 0
        %759 = vmatpush1.bf16.xpose.msra.mxu0 0
        %760 = vmatprep.mubr.bf16.mxu0 0
        %761 = vmatmul.mubr.bf16.gmra.mrb[0].mxu0 %v723
        %v762 = vpop.f32.mrb[0].mxu0
        %v763 = vadd.f32 %v721, %v762
        %v764 = vpop.f32.mrb[0].mxu0
        %v765 = vpop.f32.mrb[0].mxu0
        %v766 = vpop.f32.mrb[0].mxu0
        %767 = vdwg.mxu0
        %v768 = vld [vmem:[%s385] sm:$0x1]
        %v769 = vmul.f32 %v763, %v768
        %vm770 = vcmask 57344
        %771 = vst.msk [vmem:[%s374] sm:$0x1] %vm770, %v769
        %s772 = sand.u32 %s258, 1
        %s773 = scalar_lea.sflag [#allocation4], %s772
        %s774 = sand.u32 %s258, 1
        %s775 = scalar_lea.vmem [#allocation3], %s774
        // Predicated region
        $region61: #{tpu_custom_call.1} parent=59 // pred_check
          %p776 = pneg %p268
        $region62: #{tpu_custom_call.1} parent=59 // pred_check_branch
          %778 = sbr.rel (%p776) target = $region64
        $region63: #{tpu_custom_call.1} parent=59 // pred_region
          %s780 = ssub.s32 16, 16
          %781 = vsyncadd %s773, %s780
          %s782 = smul.addr %s25, 16
          %s783 = scalar_lea.hbm %s10, %s782
          %s785 = sshll.u32 %s775, 4
          %s786 = int_to_ptr.vmem [resolvable:$true] %s785
          %788 = dma.vmem_to_hbm [thread:$0]  %s786, 16, %s783, %s773
        $region64: #{tpu_custom_call.1} parent=59 // pred_fallthru
          _
      $region60: #{tpu_custom_call.1} parent=5 // pred_fallthru
        _
      %p789 = scmp.le.s32.totalorder 2, %s20
      // Predicated region
      $region65: #{tpu_custom_call.1} parent=5 // pred_check
        %p790 = pneg %p789
      $region66: #{tpu_custom_call.1} parent=5 // pred_check_branch
        %792 = sbr.rel (%p790) target = $region68
      $region67: #{tpu_custom_call.1} parent=5 // pred_region
        %s793 = ssub.s32 %s20, 2
        // Predicated region
        $region69: #{tpu_custom_call.1} parent=67 // pred_check
          %p794 = pneg %p274
        $region70: #{tpu_custom_call.1} parent=67 // pred_check_branch
          %796 = sbr.rel (%p794) target = $region72
        $region71: #{tpu_custom_call.1} parent=67 // pred_region
          %s797 = sand.u32 %s259, 1
          %s798 = scalar_lea.sflag [#allocation4], %s797
          %s799 = sand.u32 %s259, 1
          %s800 = scalar_lea.vmem [#allocation3], %s799
          %801 = dma.done %s798, 16
        $region72: #{tpu_custom_call.1} parent=67 // pred_fallthru
          _
      $region68: #{tpu_custom_call.1} parent=5 // pred_fallthru
        _
    $region6: #{tpu_custom_call.1} parent=1 // loop_footer
      %s24 = sadd.s32 1, %s20
    $region7: #{tpu_custom_call.1} parent=1 // loop_footer_branch
      %19 = sbr.rel target = $region3
    $region8: #{tpu_custom_call.1} parent=1 // loop_exit
      _
    %802 = vsyncpa [#allocation4], 1
    %s803 = scalar_lea.sflag [#allocation4], 1
    %804 = vsyncpa %s803, 1

</llo_original>
